<compile_context>
chip_gen: v6e
topology: v6e:2x2x1
jax: 0.10.0
libtpu: 0.0.40
codegen_flags: <defaults>
</compile_context>

<pallas_src>
import functools
import numpy as np
import jax
import jax.numpy as jnp
from jax.experimental import pallas as pl
from jax.experimental.pallas import tpu as pltpu


def attribute_forward_kernel(emb_ref, hr_ref, wih_ref, whh_ref, b_ref, factor_ref,
                             out_ref, *, B, L, D, margin):
    """Fused pos+neg LSTM tail-encoder + L1 distance + margin combine.

    Batch-on-lanes (transposed) layout; LSTM gate rows pre-permuted to [i, f, o, g].

    emb_ref    : (D, L*2B)  bf16  char embeddings; column block t holds timestep t
                                   (pos batch cols then neg batch cols within a block)
    hr_ref     : (D, 2B)    f32   (entities_emb[h] + rel_emb[r])^T, pos cols then neg cols
    wih_ref    : (4D, D)    bf16  W_ih, gate rows permuted [i,f,o,g]
    whh_ref    : (4D, D)    bf16  W_hh, gate rows permuted [i,f,o,g]
    b_ref      : (4D, 1)    f32   b_ih + b_hh, permuted [i,f,o,g]
    factor_ref : (1, B)     f32   alpha[r] for the positive triplets
    out_ref    : (1, B)     f32   rt = max(alpha[r]*(pd-nd) + margin, 0)
    """
    B2 = 2 * B
    whh = whh_ref[...]                  # (4D, D) bf16
    bias = b_ref[...]                   # (4D, 1) f32

    # Hoisted input projection: ONE (4D, D) x (D, L*2B) MXU matmul, bias folded in.
    # f32 accumulate/storage; at production tiles consider bf16 storage on v7x
    # (halves the dominant VMEM consumer) — see TODO in the wrapper.
    xproj = (jnp.dot(wih_ref[...], emb_ref[...], preferred_element_type=jnp.float32)
             + bias)                    # (4D, L*2B) f32

    def gate_step(gates, c, first=False):
        # gates: (4D, 2B). Gate split = sublane slices at multiples of D (aligned for
        # D % 8 == 0); all elementwise math is lane-dense over the 2B batch columns.
        s = jax.nn.sigmoid(gates[0:3 * D, :])      # one EUP pass over i, f, o only
        i = s[0:D, :]
        f = s[D:2 * D, :]
        o = s[2 * D:3 * D, :]
        g = jnp.tanh(gates[3 * D:4 * D, :])
        c = i * g if first else f * c + i * g      # c == 0 at t == 0
        h = o * jnp.tanh(c)
        return h, c

    # t = 0: h == c == 0, so the W_hh @ h matmul (and the bf16 cast) is skipped exactly.
    h, c = gate_step(xproj[:, 0:B2], None, first=True)

    # L is small & static -> fully unrolled; only W_hh @ h remains on the serial path.
    # TODO(synk): at production tiles, verify in the bundle dump that Mosaic keeps the
    # (4D, D) recurrence weight staged in the MXU across steps (else use
    # pltpu.matmul_push_rhs / matmul_acc_lhs explicitly).
    for t in range(1, L):
        gates = (xproj[:, t * B2:(t + 1) * B2]
                 + jnp.dot(whh, h.astype(jnp.bfloat16),
                           preferred_element_type=jnp.float32))   # (4D, 2B) f32
        h, c = gate_step(gates, c)

    diff = hr_ref[...] - h                                    # (D, 2B)
    dist = jnp.sum(jnp.abs(diff), axis=0, keepdims=True)      # (1, 2B)  L1 norm (self.norm == 1)
    pd = dist[:, 0:B]
    nd = dist[:, B:2 * B]
    # rt = max(alpha[r] * (pd - nd) + margin, 0)  -- lane-dense (1, B) store.
    out_ref[...] = jnp.maximum(factor_ref[...] * (pd - nd) + margin, 0.0)


def pallas_attribute_forward(pos_triplets, neg_triplets, params, *, D, L, margin=1.0):
    ent_a = params["entities_emb_a"]
    rel = params["rel_embeddings"]
    char = params["char_embeddings"]
    lut_a = params["attr_lookup_table_a"]

    def hr_and_seq(triplets):
        heads = triplets[:, 0]
        rels = triplets[:, 1]
        tails = triplets[:, 2]
        # Normalize only the gathered head rows (row-wise L2 commutes with the gather,
        # so pd/nd match normalizing the full table). The PyTorch in-place full-table
        # write-back is a training-side effect with no functional-JAX equivalent.
        h_emb = ent_a[heads]
        h_emb = h_emb / jnp.linalg.norm(h_emb, ord=2, axis=1, keepdims=True)
        hr = h_emb + rel[rels]                              # (B, D)
        chars = lut_a[tails]                                # (B, L) char indices
        # Faithful reproduction of char_embeddings[attr.view(-1,1), :].view(L, B, D)
        # (including the upstream .view batch/timestep interleave quirk).
        emb = char[chars.reshape(-1)].reshape(L, chars.shape[0], D)
        return hr.astype(jnp.float32), emb

    pos_hr, pos_emb = hr_and_seq(pos_triplets)
    neg_hr, neg_emb = hr_and_seq(neg_triplets)
    B = pos_triplets.shape[0]
    B2 = 2 * B                                              # keep 2B a multiple of 8

    # Fuse pos/neg into one 2B batch; transpose to batch-on-lanes layout:
    #   emb_t[d, t*2B + b] = emb3[t, b, d]
    emb3 = jnp.concatenate([pos_emb, neg_emb], axis=1)                       # (L, 2B, D)
    emb_t = jnp.transpose(emb3, (2, 0, 1)).reshape(D, L * B2).astype(jnp.bfloat16)  # (D, L*2B)
    hr_t = jnp.concatenate([pos_hr, neg_hr], axis=0).T                       # (D, 2B) f32

    wih = params["lstm_w_ih_ifog"]                          # (4D, D) bf16, gate-permuted
    whh = params["lstm_w_hh_ifog"]                          # (4D, D) bf16, gate-permuted
    bias = params["lstm_bias_ifog"]                         # (4D, 1) f32, b_ih + b_hh
    factor = params["alpha"][pos_triplets[:, 1]].reshape(1, B).astype(jnp.float32)

    # Advisory cost estimate (matmul flops + transcendentals + bytes moved).
    flops = 2 * (4 * D) * D * (L * B2) + (L - 1) * 2 * (4 * D) * D * B2
    transcendentals = L * B2 * (3 * D + 2 * D)
    bytes_accessed = int(emb_t.size * 2 + hr_t.size * 4 + wih.size * 2 + whh.size * 2
                         + bias.size * 4 + factor.size * 4 + B * 4)

    kernel = functools.partial(attribute_forward_kernel, B=B, L=L, D=D, margin=float(margin))
    vmem = lambda: pl.BlockSpec(memory_space=pltpu.MemorySpace.VMEM)
    # TODO(synk): at production batch sizes add a batch-lane grid: pass emb 3-D as
    # (L, D, 2B) with BlockSpec (L, D, T) / index_map (0, 0, i), weights/bias with
    # constant index_maps so they stay VMEM-resident, dimension_semantics=("parallel",)
    # to use both v7x TensorCores, and cap the per-tile f32 xproj (4*L*4D bytes/row)
    # at ~8-16 MiB — or store xproj in bf16 — to fit v7x's 64 MiB VMEM; raise
    # vmem_limit_bytes accordingly (v5e: keep tile + double buffers under ~14 MiB).
    out = pl.pallas_call(
        kernel,
        out_shape=jax.ShapeDtypeStruct((1, B), jnp.float32),
        in_specs=[vmem() for _ in range(6)],
        out_specs=vmem(),
        cost_estimate=pl.CostEstimate(flops=flops, transcendentals=transcendentals,
                                      bytes_accessed=bytes_accessed),
        compiler_params=pltpu.CompilerParams(vmem_limit_bytes=32 * 1024 * 1024),
    )(emb_t, hr_t, wih, whh, bias, factor)
    return out.reshape(B)


def _permute_gate_rows_ifgo_to_ifog(w, D):
    # PyTorch LSTM gate-row order is [i, f, g, o]; reorder to [i, f, o, g] so the
    # kernel's single sigmoid covers exactly the first 3D rows.
    return jnp.concatenate([w[0:2 * D], w[3 * D:4 * D], w[2 * D:3 * D]], axis=0)


def init_params(key, *, entity_count_a, entity_count_b, merged_rel_size,
                charset_size, D, L):
    ks = jax.random.split(key, 10)
    rng = 6.0 / np.sqrt(D)
    rel = jax.random.uniform(ks[0], (merged_rel_size, D), jnp.float32, -rng, rng)
    rel = rel / jnp.sum(jnp.abs(rel), axis=1, keepdims=True)   # L1 row-normalize
    ent_a = jax.random.uniform(ks[1], (entity_count_a, D), jnp.float32, -rng, rng)
    ent_b = jax.random.uniform(ks[2], (entity_count_b, D), jnp.float32, -rng, rng)
    char = jnp.eye(charset_size, D, dtype=jnp.float32)         # char_embeddings = eye(C, D)
    k = 1.0 / np.sqrt(D)                                       # PyTorch LSTM default init range
    w_ih = jax.random.uniform(ks[3], (4 * D, D), jnp.float32, -k, k)
    w_hh = jax.random.uniform(ks[4], (4 * D, D), jnp.float32, -k, k)
    b_ih = jax.random.uniform(ks[5], (4 * D,), jnp.float32, -k, k)
    b_hh = jax.random.uniform(ks[6], (4 * D,), jnp.float32, -k, k)
    alpha = jax.random.uniform(ks[7], (merged_rel_size,), jnp.float32, 0.0, 1.0)
    lut_a = jax.random.randint(ks[8], (entity_count_a, L), 0, charset_size)
    lut_b = jax.random.randint(ks[9], (entity_count_b, L), 0, charset_size)
    bias = (b_ih + b_hh).reshape(4 * D, 1)
    return dict(
        entities_emb_a=ent_a, entities_emb_b=ent_b, rel_embeddings=rel,
        char_embeddings=char, lstm_w_ih=w_ih, lstm_w_hh=w_hh,
        lstm_b_ih=b_ih, lstm_b_hh=b_hh, alpha=alpha,
        attr_lookup_table_a=lut_a, attr_lookup_table_b=lut_b,
        # Precomputed once (perf): gate-permuted bf16 weights + fused f32 bias column.
        lstm_w_ih_ifog=_permute_gate_rows_ifgo_to_ifog(w_ih, D).astype(jnp.bfloat16),
        lstm_w_hh_ifog=_permute_gate_rows_ifgo_to_ifog(w_hh, D).astype(jnp.bfloat16),
        lstm_bias_ifog=_permute_gate_rows_ifgo_to_ifog(bias, D).astype(jnp.float32),
    )


if __name__ == "__main__":
    # Small, module-consistent shapes.
    D = 32                # features_dim
    L = 8                 # max_char_length
    B = 8                 # triplet batch
    entity_count_a = 16
    entity_count_b = 16
    merged_rel_size = 4
    charset_size = 16

    params = init_params(jax.random.PRNGKey(0),
                         entity_count_a=entity_count_a,
                         entity_count_b=entity_count_b,
                         merged_rel_size=merged_rel_size,
                         charset_size=charset_size, D=D, L=L)

    k1, k2, k3, k4, k5, k6 = jax.random.split(jax.random.PRNGKey(1), 6)
    positive_triplets = jnp.stack([
        jax.random.randint(k1, (B,), 0, entity_count_a),
        jax.random.randint(k2, (B,), 0, merged_rel_size),
        jax.random.randint(k3, (B,), 0, entity_count_a),
    ], axis=1)
    negative_triplets = jnp.stack([
        jax.random.randint(k4, (B,), 0, entity_count_a),
        positive_triplets[:, 1],   # negatives share the relation (typical corruption)
        jax.random.randint(k6, (B,), 0, entity_count_a),
    ], axis=1)

    rt = pallas_attribute_forward(positive_triplets, negative_triplets, params,
                                  D=D, L=L, margin=1.0)
    jax.block_until_ready(rt)
    assert rt.shape == (B,) and bool(jnp.all(rt >= 0.0)) and bool(jnp.all(jnp.isfinite(rt)))
    print("KERNEL_OK")
</pallas_src>

<mosaic_0001>
module attributes {stable_mosaic.version = 11 : i64} {
  func.func @attribute_forward_kernel(%arg0: memref<32x128xbf16, #tpu.memory_space<vmem>>, %arg1: memref<32x16xf32, #tpu.memory_space<vmem>>, %arg2: memref<128x32xbf16, #tpu.memory_space<vmem>>, %arg3: memref<128x32xbf16, #tpu.memory_space<vmem>>, %arg4: memref<128x1xf32, #tpu.memory_space<vmem>>, %arg5: memref<1x8xf32, #tpu.memory_space<vmem>>, %arg6: memref<1x8xf32, #tpu.memory_space<vmem>>) attributes {dimension_semantics = [], scalar_prefetch = 0 : i64, scratch_operands = 0 : i64, tpu.core_type = #tpu.core_type<tc>} {
    %c0 = arith.constant 0 : index
    %c0_0 = arith.constant 0 : index
    %0 = vector.load %arg3[%c0, %c0_0] : memref<128x32xbf16, #tpu.memory_space<vmem>>, vector<128x32xbf16>
    %c0_1 = arith.constant 0 : index
    %c0_2 = arith.constant 0 : index
    %1 = vector.load %arg4[%c0_1, %c0_2] : memref<128x1xf32, #tpu.memory_space<vmem>>, vector<128x1xf32>
    %c0_3 = arith.constant 0 : index
    %c0_4 = arith.constant 0 : index
    %2 = vector.load %arg2[%c0_3, %c0_4] : memref<128x32xbf16, #tpu.memory_space<vmem>>, vector<128x32xbf16>
    %c0_5 = arith.constant 0 : index
    %c0_6 = arith.constant 0 : index
    %3 = vector.load %arg0[%c0_5, %c0_6] : memref<32x128xbf16, #tpu.memory_space<vmem>>, vector<32x128xbf16>
    %cst = arith.constant dense<0.000000e+00> : vector<128x128xf32>
    %4 = tpu.matmul %2, %3, %cst {dimension_numbers = #tpu.dot_dimension_numbers<[1], [0], [0], [1], [0, 0, 1, 1], [], []>} : vector<128x32xbf16>, vector<32x128xbf16>, vector<128x128xf32> -> vector<128x128xf32>
    %5 = vector.broadcast %1 : vector<128x1xf32> to vector<128x128xf32>
    %6 = arith.addf %4, %5 : vector<128x128xf32>
    %7 = vector.extract_strided_slice %6 {offsets = [0, 0], sizes = [128, 16], strides = [1, 1]} : vector<128x128xf32> to vector<128x16xf32>
    %8 = vector.extract_strided_slice %7 {offsets = [0, 0], sizes = [96, 16], strides = [1, 1]} : vector<128x16xf32> to vector<96x16xf32>
    %9 = arith.negf %8 : vector<96x16xf32>
    %10 = math.exp %9 : vector<96x16xf32>
    %cst_7 = arith.constant 1.000000e+00 : f32
    %11 = vector.broadcast %cst_7 : f32 to vector<96x16xf32>
    %12 = arith.addf %11, %10 : vector<96x16xf32>
    %13 = arith.divf %11, %12 : vector<96x16xf32>
    %14 = vector.extract_strided_slice %13 {offsets = [0, 0], sizes = [32, 16], strides = [1, 1]} : vector<96x16xf32> to vector<32x16xf32>
    %15 = vector.extract_strided_slice %13 {offsets = [64, 0], sizes = [32, 16], strides = [1, 1]} : vector<96x16xf32> to vector<32x16xf32>
    %16 = vector.extract_strided_slice %7 {offsets = [96, 0], sizes = [32, 16], strides = [1, 1]} : vector<128x16xf32> to vector<32x16xf32>
    %17 = math.tanh %16 : vector<32x16xf32>
    %18 = arith.mulf %14, %17 : vector<32x16xf32>
    %19 = math.tanh %18 : vector<32x16xf32>
    %20 = arith.mulf %15, %19 : vector<32x16xf32>
    %21 = vector.extract_strided_slice %6 {offsets = [0, 16], sizes = [128, 16], strides = [1, 1]} : vector<128x128xf32> to vector<128x16xf32>
    %22 = arith.truncf %20 : vector<32x16xf32> to vector<32x16xbf16>
    %cst_8 = arith.constant dense<0.000000e+00> : vector<128x16xf32>
    %23 = tpu.matmul %0, %22, %cst_8 {dimension_numbers = #tpu.dot_dimension_numbers<[1], [0], [0], [1], [0, 0, 1, 1], [], []>} : vector<128x32xbf16>, vector<32x16xbf16>, vector<128x16xf32> -> vector<128x16xf32>
    %24 = arith.addf %21, %23 : vector<128x16xf32>
    %25 = vector.extract_strided_slice %24 {offsets = [0, 0], sizes = [96, 16], strides = [1, 1]} : vector<128x16xf32> to vector<96x16xf32>
    %26 = arith.negf %25 : vector<96x16xf32>
    %27 = math.exp %26 : vector<96x16xf32>
    %cst_9 = arith.constant 1.000000e+00 : f32
    %28 = vector.broadcast %cst_9 : f32 to vector<96x16xf32>
    %29 = arith.addf %28, %27 : vector<96x16xf32>
    %30 = arith.divf %28, %29 : vector<96x16xf32>
    %31 = vector.extract_strided_slice %30 {offsets = [0, 0], sizes = [32, 16], strides = [1, 1]} : vector<96x16xf32> to vector<32x16xf32>
    %32 = vector.extract_strided_slice %30 {offsets = [32, 0], sizes = [32, 16], strides = [1, 1]} : vector<96x16xf32> to vector<32x16xf32>
    %33 = vector.extract_strided_slice %30 {offsets = [64, 0], sizes = [32, 16], strides = [1, 1]} : vector<96x16xf32> to vector<32x16xf32>
    %34 = vector.extract_strided_slice %24 {offsets = [96, 0], sizes = [32, 16], strides = [1, 1]} : vector<128x16xf32> to vector<32x16xf32>
    %35 = math.tanh %34 : vector<32x16xf32>
    %36 = arith.mulf %32, %18 : vector<32x16xf32>
    %37 = arith.mulf %31, %35 : vector<32x16xf32>
    %38 = arith.addf %36, %37 : vector<32x16xf32>
    %39 = math.tanh %38 : vector<32x16xf32>
    %40 = arith.mulf %33, %39 : vector<32x16xf32>
    %41 = vector.extract_strided_slice %6 {offsets = [0, 32], sizes = [128, 16], strides = [1, 1]} : vector<128x128xf32> to vector<128x16xf32>
    %42 = arith.truncf %40 : vector<32x16xf32> to vector<32x16xbf16>
    %cst_10 = arith.constant dense<0.000000e+00> : vector<128x16xf32>
    %43 = tpu.matmul %0, %42, %cst_10 {dimension_numbers = #tpu.dot_dimension_numbers<[1], [0], [0], [1], [0, 0, 1, 1], [], []>} : vector<128x32xbf16>, vector<32x16xbf16>, vector<128x16xf32> -> vector<128x16xf32>
    %44 = arith.addf %41, %43 : vector<128x16xf32>
    %45 = vector.extract_strided_slice %44 {offsets = [0, 0], sizes = [96, 16], strides = [1, 1]} : vector<128x16xf32> to vector<96x16xf32>
    %46 = arith.negf %45 : vector<96x16xf32>
    %47 = math.exp %46 : vector<96x16xf32>
    %cst_11 = arith.constant 1.000000e+00 : f32
    %48 = vector.broadcast %cst_11 : f32 to vector<96x16xf32>
    %49 = arith.addf %48, %47 : vector<96x16xf32>
    %50 = arith.divf %48, %49 : vector<96x16xf32>
    %51 = vector.extract_strided_slice %50 {offsets = [0, 0], sizes = [32, 16], strides = [1, 1]} : vector<96x16xf32> to vector<32x16xf32>
    %52 = vector.extract_strided_slice %50 {offsets = [32, 0], sizes = [32, 16], strides = [1, 1]} : vector<96x16xf32> to vector<32x16xf32>
    %53 = vector.extract_strided_slice %50 {offsets = [64, 0], sizes = [32, 16], strides = [1, 1]} : vector<96x16xf32> to vector<32x16xf32>
    %54 = vector.extract_strided_slice %44 {offsets = [96, 0], sizes = [32, 16], strides = [1, 1]} : vector<128x16xf32> to vector<32x16xf32>
    %55 = math.tanh %54 : vector<32x16xf32>
    %56 = arith.mulf %52, %38 : vector<32x16xf32>
    %57 = arith.mulf %51, %55 : vector<32x16xf32>
    %58 = arith.addf %56, %57 : vector<32x16xf32>
    %59 = math.tanh %58 : vector<32x16xf32>
    %60 = arith.mulf %53, %59 : vector<32x16xf32>
    %61 = vector.extract_strided_slice %6 {offsets = [0, 48], sizes = [128, 16], strides = [1, 1]} : vector<128x128xf32> to vector<128x16xf32>
    %62 = arith.truncf %60 : vector<32x16xf32> to vector<32x16xbf16>
    %cst_12 = arith.constant dense<0.000000e+00> : vector<128x16xf32>
    %63 = tpu.matmul %0, %62, %cst_12 {dimension_numbers = #tpu.dot_dimension_numbers<[1], [0], [0], [1], [0, 0, 1, 1], [], []>} : vector<128x32xbf16>, vector<32x16xbf16>, vector<128x16xf32> -> vector<128x16xf32>
    %64 = arith.addf %61, %63 : vector<128x16xf32>
    %65 = vector.extract_strided_slice %64 {offsets = [0, 0], sizes = [96, 16], strides = [1, 1]} : vector<128x16xf32> to vector<96x16xf32>
    %66 = arith.negf %65 : vector<96x16xf32>
    %67 = math.exp %66 : vector<96x16xf32>
    %cst_13 = arith.constant 1.000000e+00 : f32
    %68 = vector.broadcast %cst_13 : f32 to vector<96x16xf32>
    %69 = arith.addf %68, %67 : vector<96x16xf32>
    %70 = arith.divf %68, %69 : vector<96x16xf32>
    %71 = vector.extract_strided_slice %70 {offsets = [0, 0], sizes = [32, 16], strides = [1, 1]} : vector<96x16xf32> to vector<32x16xf32>
    %72 = vector.extract_strided_slice %70 {offsets = [32, 0], sizes = [32, 16], strides = [1, 1]} : vector<96x16xf32> to vector<32x16xf32>
    %73 = vector.extract_strided_slice %70 {offsets = [64, 0], sizes = [32, 16], strides = [1, 1]} : vector<96x16xf32> to vector<32x16xf32>
    %74 = vector.extract_strided_slice %64 {offsets = [96, 0], sizes = [32, 16], strides = [1, 1]} : vector<128x16xf32> to vector<32x16xf32>
    %75 = math.tanh %74 : vector<32x16xf32>
    %76 = arith.mulf %72, %58 : vector<32x16xf32>
    %77 = arith.mulf %71, %75 : vector<32x16xf32>
    %78 = arith.addf %76, %77 : vector<32x16xf32>
    %79 = math.tanh %78 : vector<32x16xf32>
    %80 = arith.mulf %73, %79 : vector<32x16xf32>
    %81 = vector.extract_strided_slice %6 {offsets = [0, 64], sizes = [128, 16], strides = [1, 1]} : vector<128x128xf32> to vector<128x16xf32>
    %82 = arith.truncf %80 : vector<32x16xf32> to vector<32x16xbf16>
    %cst_14 = arith.constant dense<0.000000e+00> : vector<128x16xf32>
    %83 = tpu.matmul %0, %82, %cst_14 {dimension_numbers = #tpu.dot_dimension_numbers<[1], [0], [0], [1], [0, 0, 1, 1], [], []>} : vector<128x32xbf16>, vector<32x16xbf16>, vector<128x16xf32> -> vector<128x16xf32>
    %84 = arith.addf %81, %83 : vector<128x16xf32>
    %85 = vector.extract_strided_slice %84 {offsets = [0, 0], sizes = [96, 16], strides = [1, 1]} : vector<128x16xf32> to vector<96x16xf32>
    %86 = arith.negf %85 : vector<96x16xf32>
    %87 = math.exp %86 : vector<96x16xf32>
    %cst_15 = arith.constant 1.000000e+00 : f32
    %88 = vector.broadcast %cst_15 : f32 to vector<96x16xf32>
    %89 = arith.addf %88, %87 : vector<96x16xf32>
    %90 = arith.divf %88, %89 : vector<96x16xf32>
    %91 = vector.extract_strided_slice %90 {offsets = [0, 0], sizes = [32, 16], strides = [1, 1]} : vector<96x16xf32> to vector<32x16xf32>
    %92 = vector.extract_strided_slice %90 {offsets = [32, 0], sizes = [32, 16], strides = [1, 1]} : vector<96x16xf32> to vector<32x16xf32>
    %93 = vector.extract_strided_slice %90 {offsets = [64, 0], sizes = [32, 16], strides = [1, 1]} : vector<96x16xf32> to vector<32x16xf32>
    %94 = vector.extract_strided_slice %84 {offsets = [96, 0], sizes = [32, 16], strides = [1, 1]} : vector<128x16xf32> to vector<32x16xf32>
    %95 = math.tanh %94 : vector<32x16xf32>
    %96 = arith.mulf %92, %78 : vector<32x16xf32>
    %97 = arith.mulf %91, %95 : vector<32x16xf32>
    %98 = arith.addf %96, %97 : vector<32x16xf32>
    %99 = math.tanh %98 : vector<32x16xf32>
    %100 = arith.mulf %93, %99 : vector<32x16xf32>
    %101 = vector.extract_strided_slice %6 {offsets = [0, 80], sizes = [128, 16], strides = [1, 1]} : vector<128x128xf32> to vector<128x16xf32>
    %102 = arith.truncf %100 : vector<32x16xf32> to vector<32x16xbf16>
    %cst_16 = arith.constant dense<0.000000e+00> : vector<128x16xf32>
    %103 = tpu.matmul %0, %102, %cst_16 {dimension_numbers = #tpu.dot_dimension_numbers<[1], [0], [0], [1], [0, 0, 1, 1], [], []>} : vector<128x32xbf16>, vector<32x16xbf16>, vector<128x16xf32> -> vector<128x16xf32>
    %104 = arith.addf %101, %103 : vector<128x16xf32>
    %105 = vector.extract_strided_slice %104 {offsets = [0, 0], sizes = [96, 16], strides = [1, 1]} : vector<128x16xf32> to vector<96x16xf32>
    %106 = arith.negf %105 : vector<96x16xf32>
    %107 = math.exp %106 : vector<96x16xf32>
    %cst_17 = arith.constant 1.000000e+00 : f32
    %108 = vector.broadcast %cst_17 : f32 to vector<96x16xf32>
    %109 = arith.addf %108, %107 : vector<96x16xf32>
    %110 = arith.divf %108, %109 : vector<96x16xf32>
    %111 = vector.extract_strided_slice %110 {offsets = [0, 0], sizes = [32, 16], strides = [1, 1]} : vector<96x16xf32> to vector<32x16xf32>
    %112 = vector.extract_strided_slice %110 {offsets = [32, 0], sizes = [32, 16], strides = [1, 1]} : vector<96x16xf32> to vector<32x16xf32>
    %113 = vector.extract_strided_slice %110 {offsets = [64, 0], sizes = [32, 16], strides = [1, 1]} : vector<96x16xf32> to vector<32x16xf32>
    %114 = vector.extract_strided_slice %104 {offsets = [96, 0], sizes = [32, 16], strides = [1, 1]} : vector<128x16xf32> to vector<32x16xf32>
    %115 = math.tanh %114 : vector<32x16xf32>
    %116 = arith.mulf %112, %98 : vector<32x16xf32>
    %117 = arith.mulf %111, %115 : vector<32x16xf32>
    %118 = arith.addf %116, %117 : vector<32x16xf32>
    %119 = math.tanh %118 : vector<32x16xf32>
    %120 = arith.mulf %113, %119 : vector<32x16xf32>
    %121 = vector.extract_strided_slice %6 {offsets = [0, 96], sizes = [128, 16], strides = [1, 1]} : vector<128x128xf32> to vector<128x16xf32>
    %122 = arith.truncf %120 : vector<32x16xf32> to vector<32x16xbf16>
    %cst_18 = arith.constant dense<0.000000e+00> : vector<128x16xf32>
    %123 = tpu.matmul %0, %122, %cst_18 {dimension_numbers = #tpu.dot_dimension_numbers<[1], [0], [0], [1], [0, 0, 1, 1], [], []>} : vector<128x32xbf16>, vector<32x16xbf16>, vector<128x16xf32> -> vector<128x16xf32>
    %124 = arith.addf %121, %123 : vector<128x16xf32>
    %125 = vector.extract_strided_slice %124 {offsets = [0, 0], sizes = [96, 16], strides = [1, 1]} : vector<128x16xf32> to vector<96x16xf32>
    %126 = arith.negf %125 : vector<96x16xf32>
    %127 = math.exp %126 : vector<96x16xf32>
    %cst_19 = arith.constant 1.000000e+00 : f32
    %128 = vector.broadcast %cst_19 : f32 to vector<96x16xf32>
    %129 = arith.addf %128, %127 : vector<96x16xf32>
    %130 = arith.divf %128, %129 : vector<96x16xf32>
    %131 = vector.extract_strided_slice %130 {offsets = [0, 0], sizes = [32, 16], strides = [1, 1]} : vector<96x16xf32> to vector<32x16xf32>
    %132 = vector.extract_strided_slice %130 {offsets = [32, 0], sizes = [32, 16], strides = [1, 1]} : vector<96x16xf32> to vector<32x16xf32>
    %133 = vector.extract_strided_slice %130 {offsets = [64, 0], sizes = [32, 16], strides = [1, 1]} : vector<96x16xf32> to vector<32x16xf32>
    %134 = vector.extract_strided_slice %124 {offsets = [96, 0], sizes = [32, 16], strides = [1, 1]} : vector<128x16xf32> to vector<32x16xf32>
    %135 = math.tanh %134 : vector<32x16xf32>
    %136 = arith.mulf %132, %118 : vector<32x16xf32>
    %137 = arith.mulf %131, %135 : vector<32x16xf32>
    %138 = arith.addf %136, %137 : vector<32x16xf32>
    %139 = math.tanh %138 : vector<32x16xf32>
    %140 = arith.mulf %133, %139 : vector<32x16xf32>
    %141 = vector.extract_strided_slice %6 {offsets = [0, 112], sizes = [128, 16], strides = [1, 1]} : vector<128x128xf32> to vector<128x16xf32>
    %142 = arith.truncf %140 : vector<32x16xf32> to vector<32x16xbf16>
    %cst_20 = arith.constant dense<0.000000e+00> : vector<128x16xf32>
    %143 = tpu.matmul %0, %142, %cst_20 {dimension_numbers = #tpu.dot_dimension_numbers<[1], [0], [0], [1], [0, 0, 1, 1], [], []>} : vector<128x32xbf16>, vector<32x16xbf16>, vector<128x16xf32> -> vector<128x16xf32>
    %144 = arith.addf %141, %143 : vector<128x16xf32>
    %145 = vector.extract_strided_slice %144 {offsets = [0, 0], sizes = [96, 16], strides = [1, 1]} : vector<128x16xf32> to vector<96x16xf32>
    %146 = arith.negf %145 : vector<96x16xf32>
    %147 = math.exp %146 : vector<96x16xf32>
    %cst_21 = arith.constant 1.000000e+00 : f32
    %148 = vector.broadcast %cst_21 : f32 to vector<96x16xf32>
    %149 = arith.addf %148, %147 : vector<96x16xf32>
    %150 = arith.divf %148, %149 : vector<96x16xf32>
    %151 = vector.extract_strided_slice %150 {offsets = [0, 0], sizes = [32, 16], strides = [1, 1]} : vector<96x16xf32> to vector<32x16xf32>
    %152 = vector.extract_strided_slice %150 {offsets = [32, 0], sizes = [32, 16], strides = [1, 1]} : vector<96x16xf32> to vector<32x16xf32>
    %153 = vector.extract_strided_slice %150 {offsets = [64, 0], sizes = [32, 16], strides = [1, 1]} : vector<96x16xf32> to vector<32x16xf32>
    %154 = vector.extract_strided_slice %144 {offsets = [96, 0], sizes = [32, 16], strides = [1, 1]} : vector<128x16xf32> to vector<32x16xf32>
    %155 = math.tanh %154 : vector<32x16xf32>
    %156 = arith.mulf %152, %138 : vector<32x16xf32>
    %157 = arith.mulf %151, %155 : vector<32x16xf32>
    %158 = arith.addf %156, %157 : vector<32x16xf32>
    %159 = math.tanh %158 : vector<32x16xf32>
    %160 = arith.mulf %153, %159 : vector<32x16xf32>
    %c0_22 = arith.constant 0 : index
    %c0_23 = arith.constant 0 : index
    %161 = vector.load %arg1[%c0_22, %c0_23] : memref<32x16xf32, #tpu.memory_space<vmem>>, vector<32x16xf32>
    %162 = arith.subf %161, %160 : vector<32x16xf32>
    %163 = math.absf %162 : vector<32x16xf32>
    %cst_24 = arith.constant dense<0.000000e+00> : vector<16xf32>
    %164 = vector.multi_reduction <add>, %163, %cst_24 [0] : vector<32x16xf32> to vector<16xf32>
    %165 = vector.shape_cast %164 : vector<16xf32> to vector<1x16xf32>
    %166 = vector.extract_strided_slice %165 {offsets = [0, 0], sizes = [1, 8], strides = [1, 1]} : vector<1x16xf32> to vector<1x8xf32>
    %167 = vector.extract_strided_slice %165 {offsets = [0, 8], sizes = [1, 8], strides = [1, 1]} : vector<1x16xf32> to vector<1x8xf32>
    %c0_25 = arith.constant 0 : index
    %c0_26 = arith.constant 0 : index
    %168 = vector.load %arg5[%c0_25, %c0_26] : memref<1x8xf32, #tpu.memory_space<vmem>>, vector<1x8xf32>
    %169 = arith.subf %166, %167 : vector<1x8xf32>
    %170 = arith.mulf %168, %169 : vector<1x8xf32>
    %cst_27 = arith.constant 1.000000e+00 : f32
    %171 = vector.broadcast %cst_27 : f32 to vector<1x8xf32>
    %172 = arith.addf %170, %171 : vector<1x8xf32>
    %cst_28 = arith.constant 0.000000e+00 : f32
    %173 = vector.broadcast %cst_28 : f32 to vector<1x8xf32>
    %174 = arith.maximumf %172, %173 : vector<1x8xf32>
    %c0_29 = arith.constant 0 : index
    %c0_30 = arith.constant 0 : index
    %175 = vector.load %arg6[%c0_29, %c0_30] : memref<1x8xf32, #tpu.memory_space<vmem>>, vector<1x8xf32>
    tpu.vector_store %arg6[%c0_29, %c0_30], %174 {strides = array<i32>} : memref<1x8xf32, #tpu.memory_space<vmem>>, vector<1x8xf32>,
    return
  }
}

</mosaic_0001>

<llo_original>
// kernel: tpu_custom_call.1
$region0: #{tpu_custom_call.1}
  #allocation0 [shape = 'u32[]', space=smem, size = 0x4, offset = 0x4, fixed_abs, tag = 'smem constant byte address 0x4 - core index']
  #allocation1 [shape = 'u32[144,128]{1,0:T(1,128)}', space=vmem, size = 0x12000, scoped, tag = 'internal scratch']
  %s0 = inlined_call_operand.vmem [shape: bf16[32,128], index: 0, kind: input, shape index: {}]
  %s1 = inlined_call_operand.vmem [shape: f32[32,16], index: 1, kind: input, shape index: {}]
  %s2 = inlined_call_operand.vmem [shape: bf16[128,32], index: 2, kind: input, shape index: {}]
  %s3 = inlined_call_operand.vmem [shape: bf16[128,32], index: 3, kind: input, shape index: {}]
  %s4 = inlined_call_operand.vmem [shape: f32[128,1], index: 4, kind: input, shape index: {}]
  %s5 = inlined_call_operand.vmem [shape: f32[1,8], index: 5, kind: input, shape index: {}]
  %s6 = inlined_call_operand.hbm [shape: f32[1,8], index: 6, kind: output, shape index: {}]
  %s7 = sld [smem:[#allocation0]]
  $region34: #{tpu_custom_call.1} parent=0
    _
  %s9 = ssub.s32 1, %s7
  %s10 = scalar_select 0, %s9, %s7
  $region1: #{tpu_custom_call.1} parent=0
    #allocation2 [shape = 'u8[512]{0}', space=vmem, size = 0x400, scoped, tag = 'output window, operand 0, single buffered']
    #allocation3 [shape = 's32[1]{0}', space=sflag, size = 0x4, scoped, tag = 'scoped memory for tpu_custom_call.1']
    %11 = vsyncpa [#allocation3], 0
    // Predicated region
    $region2: #{tpu_custom_call.1} parent=1 // pred_check
      _
    $region3: #{tpu_custom_call.1} parent=1 // pred_check_branch
      %13 = sbr.rel (0) target = $region5
    $region4: #{tpu_custom_call.1} parent=1 // pred_region
      _
    $region5: #{tpu_custom_call.1} parent=1 // pred_fallthru
      _
    // Predicated region
    $region6: #{tpu_custom_call.1} parent=1 // pred_check
      _
    $region7: #{tpu_custom_call.1} parent=1 // pred_check_branch
      %15 = sbr.rel (0) target = $region9
    $region8: #{tpu_custom_call.1} parent=1 // pred_region
      _
    $region9: #{tpu_custom_call.1} parent=1 // pred_fallthru
      _
    // Predicated region
    $region10: #{tpu_custom_call.1} parent=1 // pred_check
      _
    $region11: #{tpu_custom_call.1} parent=1 // pred_check_branch
      %17 = sbr.rel (0) target = $region13
    $region12: #{tpu_custom_call.1} parent=1 // pred_region
      _
    $region13: #{tpu_custom_call.1} parent=1 // pred_fallthru
      _
    // Predicated region
    $region14: #{tpu_custom_call.1} parent=1 // pred_check
      _
    $region15: #{tpu_custom_call.1} parent=1 // pred_check_branch
      %19 = sbr.rel (0) target = $region17
    $region16: #{tpu_custom_call.1} parent=1 // pred_region
      _
    $region17: #{tpu_custom_call.1} parent=1 // pred_fallthru
      _
    // Predicated region
    $region18: #{tpu_custom_call.1} parent=1 // pred_check
      _
    $region19: #{tpu_custom_call.1} parent=1 // pred_check_branch
      %21 = sbr.rel (0) target = $region21
    $region20: #{tpu_custom_call.1} parent=1 // pred_region
      _
    $region21: #{tpu_custom_call.1} parent=1 // pred_fallthru
      _
    // Predicated region
    $region22: #{tpu_custom_call.1} parent=1 // pred_check
      _
    $region23: #{tpu_custom_call.1} parent=1 // pred_check_branch
      %23 = sbr.rel (0) target = $region25
    $region24: #{tpu_custom_call.1} parent=1 // pred_region
      _
    $region25: #{tpu_custom_call.1} parent=1 // pred_fallthru
      _
    %v25 = vld [vmem:[%s3] sm:$0xf]
    %v26 = vld [vmem:[%s3 + $0x4] sm:$0xf]
    %v27 = vld [vmem:[%s3 + $0x8] sm:$0xf]
    %v28 = vld [vmem:[%s3 + $0xc] sm:$0xf]
    %v29 = vld [vmem:[%s3 + $0x10] sm:$0xf]
    %v30 = vld [vmem:[%s3 + $0x14] sm:$0xf]
    %v31 = vld [vmem:[%s3 + $0x18] sm:$0xf]
    %v32 = vld [vmem:[%s3 + $0x1c] sm:$0xf]
    %v33 = vld [vmem:[%s3 + $0x20] sm:$0xf]
    %v34 = vld [vmem:[%s3 + $0x24] sm:$0xf]
    %v35 = vld [vmem:[%s3 + $0x28] sm:$0xf]
    %v36 = vld [vmem:[%s3 + $0x2c] sm:$0xf]
    %v37 = vld [vmem:[%s3 + $0x30] sm:$0xf]
    %v38 = vld [vmem:[%s3 + $0x34] sm:$0xf]
    %v39 = vld [vmem:[%s3 + $0x38] sm:$0xf]
    %v40 = vld [vmem:[%s3 + $0x3c] sm:$0xf]
    %v41 = vld [vmem:[%s4] sm:$0xff]
    %v42 = vld [vmem:[%s4 + $0x8] sm:$0xff]
    %v43 = vld [vmem:[%s4 + $0x10] sm:$0xff]
    %v44 = vld [vmem:[%s4 + $0x18] sm:$0xff]
    %v45 = vld [vmem:[%s4 + $0x20] sm:$0xff]
    %v46 = vld [vmem:[%s4 + $0x28] sm:$0xff]
    %v47 = vld [vmem:[%s4 + $0x30] sm:$0xff]
    %v48 = vld [vmem:[%s4 + $0x38] sm:$0xff]
    %v49 = vld [vmem:[%s4 + $0x40] sm:$0xff]
    %v50 = vld [vmem:[%s4 + $0x48] sm:$0xff]
    %v51 = vld [vmem:[%s4 + $0x50] sm:$0xff]
    %v52 = vld [vmem:[%s4 + $0x58] sm:$0xff]
    %v53 = vld [vmem:[%s4 + $0x60] sm:$0xff]
    %v54 = vld [vmem:[%s4 + $0x68] sm:$0xff]
    %v55 = vld [vmem:[%s4 + $0x70] sm:$0xff]
    %v56 = vld [vmem:[%s4 + $0x78] sm:$0xff]
    %v57 = vld [vmem:[%s2] sm:$0xf]
    %v58 = vld [vmem:[%s2 + $0x4] sm:$0xf]
    %v59 = vld [vmem:[%s2 + $0x8] sm:$0xf]
    %v60 = vld [vmem:[%s2 + $0xc] sm:$0xf]
    %v61 = vld [vmem:[%s2 + $0x10] sm:$0xf]
    %v62 = vld [vmem:[%s2 + $0x14] sm:$0xf]
    %v63 = vld [vmem:[%s2 + $0x18] sm:$0xf]
    %v64 = vld [vmem:[%s2 + $0x1c] sm:$0xf]
    %v65 = vld [vmem:[%s2 + $0x20] sm:$0xf]
    %v66 = vld [vmem:[%s2 + $0x24] sm:$0xf]
    %v67 = vld [vmem:[%s2 + $0x28] sm:$0xf]
    %v68 = vld [vmem:[%s2 + $0x2c] sm:$0xf]
    %v69 = vld [vmem:[%s2 + $0x30] sm:$0xf]
    %v70 = vld [vmem:[%s2 + $0x34] sm:$0xf]
    %v71 = vld [vmem:[%s2 + $0x38] sm:$0xf]
    %v72 = vld [vmem:[%s2 + $0x3c] sm:$0xf]
    %v73 = vld [vmem:[%s0] sm:$0xf]
    %v74 = vld [vmem:[%s0 + $0x4] sm:$0xf]
    %v75 = vld [vmem:[%s0 + $0x8] sm:$0xf]
    %v76 = vld [vmem:[%s0 + $0xc] sm:$0xf]
    %78 = vset.pattern.permute.xlu0 0
    %79 = vperm.xlu0 %78, %v41
    %v80 = vpop.permute.xlu0 %79
    %83 = vset.pattern.permute.xlu0 0
    %84 = vperm.xlu0 %83, %v42
    %v85 = vpop.permute.xlu0 %84
    %88 = vset.pattern.permute.xlu0 0
    %89 = vperm.xlu0 %88, %v43
    %v90 = vpop.permute.xlu0 %89
    %93 = vset.pattern.permute.xlu0 0
    %94 = vperm.xlu0 %93, %v44
    %v95 = vpop.permute.xlu0 %94
    %98 = vset.pattern.permute.xlu0 0
    %99 = vperm.xlu0 %98, %v45
    %v100 = vpop.permute.xlu0 %99
    %103 = vset.pattern.permute.xlu0 0
    %104 = vperm.xlu0 %103, %v46
    %v105 = vpop.permute.xlu0 %104
    %108 = vset.pattern.permute.xlu0 0
    %109 = vperm.xlu0 %108, %v47
    %v110 = vpop.permute.xlu0 %109
    %113 = vset.pattern.permute.xlu0 0
    %114 = vperm.xlu0 %113, %v48
    %v115 = vpop.permute.xlu0 %114
    %118 = vset.pattern.permute.xlu0 0
    %119 = vperm.xlu0 %118, %v49
    %v120 = vpop.permute.xlu0 %119
    %123 = vset.pattern.permute.xlu0 0
    %124 = vperm.xlu0 %123, %v50
    %v125 = vpop.permute.xlu0 %124
    %128 = vset.pattern.permute.xlu0 0
    %129 = vperm.xlu0 %128, %v51
    %v130 = vpop.permute.xlu0 %129
    %133 = vset.pattern.permute.xlu0 0
    %134 = vperm.xlu0 %133, %v52
    %v135 = vpop.permute.xlu0 %134
    %138 = vset.pattern.permute.xlu0 0
    %139 = vperm.xlu0 %138, %v53
    %v140 = vpop.permute.xlu0 %139
    %143 = vset.pattern.permute.xlu0 0
    %144 = vperm.xlu0 %143, %v54
    %v145 = vpop.permute.xlu0 %144
    %148 = vset.pattern.permute.xlu0 0
    %149 = vperm.xlu0 %148, %v55
    %v150 = vpop.permute.xlu0 %149
    %153 = vset.pattern.permute.xlu0 0
    %154 = vperm.xlu0 %153, %v56
    %v155 = vpop.permute.xlu0 %154
    %v173 = vunpack.c.l.b16 %v57
    %v174 = vunpack.c.l.b16 %v58
    %v175 = vunpack.c.l.b16 %v59
    %v176 = vunpack.c.l.b16 %v60
    %v177 = vunpack.c.l.b16 %v61
    %v178 = vunpack.c.l.b16 %v62
    %v179 = vunpack.c.l.b16 %v63
    %v180 = vunpack.c.l.b16 %v64
    %v181 = vunpack.c.l.b16 %v65
    %v182 = vunpack.c.l.b16 %v66
    %v183 = vunpack.c.l.b16 %v67
    %v184 = vunpack.c.l.b16 %v68
    %v185 = vunpack.c.l.b16 %v69
    %v186 = vunpack.c.l.b16 %v70
    %v187 = vunpack.c.l.b16 %v71
    %v188 = vunpack.c.l.b16 %v72
    %v189 = vpack.c.b16 %v174, %v173
    %v190 = vpack.c.b16 %v176, %v175
    %v191 = vpack.c.b16 %v178, %v177
    %v192 = vpack.c.b16 %v180, %v179
    %v193 = vpack.c.b16 %v182, %v181
    %v194 = vpack.c.b16 %v184, %v183
    %v195 = vpack.c.b16 %v186, %v185
    %v196 = vpack.c.b16 %v188, %v187
    %v201 = vunpack.c.l.b16 %v73
    %v202 = vunpack.c.l.b16 %v74
    %v203 = vunpack.c.l.b16 %v75
    %v204 = vunpack.c.l.b16 %v76
    %v205 = vpack.c.b16 %v202, %v201
    %v206 = vpack.c.b16 %v204, %v203
    %vm209 = vcmask 261120
    %v211 = vsel %vm209, %v189, 0
    %v214 = vsel %vm209, %v190, 0
    %v217 = vsel %vm209, %v191, 0
    %v220 = vsel %vm209, %v192, 0
    %v223 = vsel %vm209, %v193, 0
    %v226 = vsel %vm209, %v194, 0
    %v229 = vsel %vm209, %v195, 0
    %v232 = vsel %vm209, %v196, 0
    %234 = vmatprep.subr.bf16.mxu0 0
    %235 = vmatpush1.bf16.msra.mxu0 0
    %236 = vmatprep.subr.bf16.mxu0 0
    %237 = vmatpush1.bf16.msra.mxu0 0
    %238 = vmatprep.subr.bf16.mxu0 0
    %239 = vmatpush1.bf16.msra.mxu0 0
    %240 = vmatprep.subr.bf16.mxu0 0
    %241 = vmatpush1.bf16.msra.mxu0 0
    %242 = vmatprep.subr.bf16.mxu0 0
    %243 = vmatpush1.bf16.msra.mxu0 0
    %244 = vmatprep.subr.bf16.mxu0 0
    %245 = vmatpush1.bf16.msra.mxu0 0
    %246 = vmatprep.subr.bf16.mxu0 0
    %247 = vmatpush1.bf16.msra.mxu0 %v206
    %248 = vmatprep.subr.bf16.mxu0 0
    %249 = vmatpush1.bf16.msra.mxu0 %v205
    %250 = vmatprep.subr.bf16.mxu0 0
    %251 = vmatpush2.bf16.msra.mxu0 0
    %252 = vmatprep.subr.bf16.mxu0 0
    %253 = vmatpush2.bf16.msra.mxu0 0
    %254 = vmatprep.subr.bf16.mxu0 0
    %255 = vmatpush2.bf16.msra.mxu0 0
    %256 = vmatprep.subr.bf16.mxu0 0
    %257 = vmatpush2.bf16.msra.mxu0 0
    %258 = vmatprep.subr.bf16.mxu0 0
    %259 = vmatpush2.bf16.msra.mxu0 0
    %260 = vmatprep.subr.bf16.mxu0 0
    %261 = vmatpush2.bf16.msra.mxu0 0
    %262 = vmatprep.subr.bf16.mxu0 0
    %263 = vmatpush2.bf16.msra.mxu0 0
    %264 = vmatprep.subr.bf16.mxu0 0
    %265 = vmatpush2.bf16.msra.mxu0 0
    %266 = vmatprep.mubr.bf16.mxu0 0
    %267 = vmatmul.mubr.bf16.gmra.mxu0 %v211
    %v268 = vpop.f32.mrf.mxu0
    %v269 = vadd.f32 %v80, %v268
    %v270 = vpop.f32.mrf.mxu0
    %v271 = vpop.f32.mrf.mxu0
    %v272 = vadd.f32 %v85, %v271
    %v273 = vpop.f32.mrf.mxu0
    %274 = vmatprep.mubr.bf16.mxu0 0
    %275 = vmatmul.mubr.bf16.gmra.mxu0 %v214
    %v276 = vpop.f32.mrf.mxu0
    %v277 = vadd.f32 %v90, %v276
    %v278 = vpop.f32.mrf.mxu0
    %v279 = vpop.f32.mrf.mxu0
    %v280 = vadd.f32 %v95, %v279
    %v281 = vpop.f32.mrf.mxu0
    %282 = vmatprep.mubr.bf16.mxu0 0
    %283 = vmatmul.mubr.bf16.gmra.mxu0 %v217
    %v284 = vpop.f32.mrf.mxu0
    %v285 = vadd.f32 %v100, %v284
    %v286 = vpop.f32.mrf.mxu0
    %v287 = vpop.f32.mrf.mxu0
    %v288 = vadd.f32 %v105, %v287
    %v289 = vpop.f32.mrf.mxu0
    %290 = vmatprep.mubr.bf16.mxu0 0
    %291 = vmatmul.mubr.bf16.gmra.mxu0 %v220
    %v292 = vpop.f32.mrf.mxu0
    %v293 = vadd.f32 %v110, %v292
    %v294 = vpop.f32.mrf.mxu0
    %v295 = vpop.f32.mrf.mxu0
    %v296 = vadd.f32 %v115, %v295
    %v297 = vpop.f32.mrf.mxu0
    %298 = vmatprep.mubr.bf16.mxu0 0
    %299 = vmatmul.mubr.bf16.gmra.mxu0 %v223
    %v300 = vpop.f32.mrf.mxu0
    %v301 = vadd.f32 %v120, %v300
    %v302 = vpop.f32.mrf.mxu0
    %v303 = vpop.f32.mrf.mxu0
    %v304 = vadd.f32 %v125, %v303
    %v305 = vpop.f32.mrf.mxu0
    %306 = vmatprep.mubr.bf16.mxu0 0
    %307 = vmatmul.mubr.bf16.gmra.mxu0 %v226
    %v308 = vpop.f32.mrf.mxu0
    %v309 = vadd.f32 %v130, %v308
    %v310 = vpop.f32.mrf.mxu0
    %v311 = vpop.f32.mrf.mxu0
    %v312 = vadd.f32 %v135, %v311
    %v313 = vpop.f32.mrf.mxu0
    %314 = vmatprep.mubr.bf16.mxu0 0
    %315 = vmatmul.mubr.bf16.gmra.mxu0 %v229
    %v316 = vpop.f32.mrf.mxu0
    %v317 = vadd.f32 %v140, %v316
    %v318 = vpop.f32.mrf.mxu0
    %v319 = vpop.f32.mrf.mxu0
    %v320 = vadd.f32 %v145, %v319
    %v321 = vpop.f32.mrf.mxu0
    %322 = vmatprep.mubr.bf16.mxu0 0
    %323 = vmatmul.mubr.bf16.gmra.mxu0 %v232
    %v324 = vpop.f32.mrf.mxu0
    %v325 = vadd.f32 %v150, %v324
    %v326 = vpop.f32.mrf.mxu0
    %v327 = vpop.f32.mrf.mxu0
    %v328 = vadd.f32 %v155, %v327
    %v329 = vpop.f32.mrf.mxu0
    %330 = vdwg.mxu0
    %v331 = vxor.u32 %v269, 2147483648
    %v332 = vxor.u32 %v272, 2147483648
    %v333 = vxor.u32 %v277, 2147483648
    %v334 = vxor.u32 %v280, 2147483648
    %v335 = vxor.u32 %v301, 2147483648
    %v336 = vxor.u32 %v304, 2147483648
    %v337 = vxor.u32 %v309, 2147483648
    %v338 = vxor.u32 %v312, 2147483648
    %v339 = vmul.f32 %v331, 1.442695
    %v340 = vpow.pop %v339
    %v341 = vmul.f32 %v332, 1.442695
    %v342 = vpow.pop %v341
    %v343 = vmul.f32 %v333, 1.442695
    %v344 = vpow.pop %v343
    %v345 = vmul.f32 %v334, 1.442695
    %v346 = vpow.pop %v345
    %v347 = vmul.f32 %v335, 1.442695
    %v348 = vpow.pop %v347
    %v349 = vmul.f32 %v336, 1.442695
    %v350 = vpow.pop %v349
    %v351 = vmul.f32 %v337, 1.442695
    %v352 = vpow.pop %v351
    %v353 = vmul.f32 %v338, 1.442695
    %v354 = vpow.pop %v353
    %v355 = vadd.f32 %v340, 1.0
    %v356 = vadd.f32 %v342, 1.0
    %v357 = vadd.f32 %v344, 1.0
    %v358 = vadd.f32 %v346, 1.0
    %v359 = vadd.f32 %v348, 1.0
    %v360 = vadd.f32 %v350, 1.0
    %v361 = vadd.f32 %v352, 1.0
    %v362 = vadd.f32 %v354, 1.0
    %v363 = vrcp.pop %v355
    %v364 = vmul.f32 1.0, %v363
    %v365 = vrcp.pop %v356
    %v366 = vmul.f32 1.0, %v365
    %v367 = vrcp.pop %v357
    %v368 = vmul.f32 1.0, %v367
    %v369 = vrcp.pop %v358
    %v370 = vmul.f32 1.0, %v369
    %v371 = vrcp.pop %v359
    %v372 = vmul.f32 1.0, %v371
    %v373 = vrcp.pop %v360
    %v374 = vmul.f32 1.0, %v373
    %v375 = vrcp.pop %v361
    %v376 = vmul.f32 1.0, %v375
    %v377 = vrcp.pop %v362
    %v378 = vmul.f32 1.0, %v377
    %v379 = vtanh.pop %v317
    %v380 = vtanh.pop %v320
    %v381 = vtanh.pop %v325
    %v382 = vtanh.pop %v328
    %v383 = vmul.f32 %v364, %v379
    %v384 = vmul.f32 %v366, %v380
    %v385 = vmul.f32 %v368, %v381
    %v386 = vmul.f32 %v370, %v382
    %v387 = vtanh.pop %v383
    %v388 = vtanh.pop %v384
    %v389 = vtanh.pop %v385
    %v390 = vtanh.pop %v386
    %v391 = vmul.f32 %v372, %v387
    %v392 = vmul.f32 %v374, %v388
    %v393 = vmul.f32 %v376, %v389
    %v394 = vmul.f32 %v378, %v390
    %v395 = vpack.c.bf16 %v392, %v391
    %v396 = vpack.c.bf16 %v394, %v393
    %v413 = vunpack.c.l.b16 %v25
    %v414 = vunpack.c.l.b16 %v26
    %v415 = vunpack.c.l.b16 %v27
    %v416 = vunpack.c.l.b16 %v28
    %v417 = vunpack.c.l.b16 %v29
    %v418 = vunpack.c.l.b16 %v30
    %v419 = vunpack.c.l.b16 %v31
    %v420 = vunpack.c.l.b16 %v32
    %v421 = vunpack.c.l.b16 %v33
    %v422 = vunpack.c.l.b16 %v34
    %v423 = vunpack.c.l.b16 %v35
    %v424 = vunpack.c.l.b16 %v36
    %v425 = vunpack.c.l.b16 %v37
    %v426 = vunpack.c.l.b16 %v38
    %v427 = vunpack.c.l.b16 %v39
    %v428 = vunpack.c.l.b16 %v40
    %v429 = vpack.c.b16 %v414, %v413
    %v430 = vpack.c.b16 %v416, %v415
    %v431 = vpack.c.b16 %v418, %v417
    %v432 = vpack.c.b16 %v420, %v419
    %v433 = vpack.c.b16 %v422, %v421
    %v434 = vpack.c.b16 %v424, %v423
    %v435 = vpack.c.b16 %v426, %v425
    %v436 = vpack.c.b16 %v428, %v427
    %v438 = vsel %vm209, %v429, 0
    %v441 = vsel %vm209, %v430, 0
    %v444 = vsel %vm209, %v431, 0
    %v447 = vsel %vm209, %v432, 0
    %v450 = vsel %vm209, %v433, 0
    %v453 = vsel %vm209, %v434, 0
    %v456 = vsel %vm209, %v435, 0
    %v459 = vsel %vm209, %v436, 0
    %461 = vmatprep.subr.bf16.mxu0 0
    %462 = vmatpush1.bf16.msra.mxu0 0
    %463 = vmatprep.subr.bf16.mxu0 0
    %464 = vmatpush1.bf16.msra.mxu0 0
    %465 = vmatprep.subr.bf16.mxu0 0
    %466 = vmatpush1.bf16.msra.mxu0 0
    %467 = vmatprep.subr.bf16.mxu0 0
    %468 = vmatpush1.bf16.msra.mxu0 0
    %469 = vmatprep.subr.bf16.mxu0 0
    %470 = vmatpush1.bf16.msra.mxu0 0
    %471 = vmatprep.subr.bf16.mxu0 0
    %472 = vmatpush1.bf16.msra.mxu0 0
    %473 = vmatprep.subr.bf16.mxu0 0
    %474 = vmatpush1.bf16.msra.mxu0 %v396
    %475 = vmatprep.subr.bf16.mxu0 0
    %476 = vmatpush1.bf16.msra.mxu0 %v395
    %477 = vmatprep.subr.bf16.mxu0 0
    %478 = vmatpush2.bf16.msra.mxu0 0
    %479 = vmatprep.subr.bf16.mxu0 0
    %480 = vmatpush2.bf16.msra.mxu0 0
    %481 = vmatprep.subr.bf16.mxu0 0
    %482 = vmatpush2.bf16.msra.mxu0 0
    %483 = vmatprep.subr.bf16.mxu0 0
    %484 = vmatpush2.bf16.msra.mxu0 0
    %485 = vmatprep.subr.bf16.mxu0 0
    %486 = vmatpush2.bf16.msra.mxu0 0
    %487 = vmatprep.subr.bf16.mxu0 0
    %488 = vmatpush2.bf16.msra.mxu0 0
    %489 = vmatprep.subr.bf16.mxu0 0
    %490 = vmatpush2.bf16.msra.mxu0 0
    %491 = vmatprep.subr.bf16.mxu0 0
    %492 = vmatpush2.bf16.msra.mxu0 0
    %493 = vmatprep.mubr.bf16.mxu0 0
    %494 = vmatmul.mubr.bf16.gmra.mxu0 %v438
    %v495 = vpop.f32.mrf.mxu0
    %v496 = vadd.f32 0.0, %v495
    %v497 = vpop.f32.mrf.mxu0
    %v498 = vpop.f32.mrf.mxu0
    %v499 = vadd.f32 0.0, %v498
    %v500 = vpop.f32.mrf.mxu0
    %501 = vmatprep.mubr.bf16.mxu0 0
    %502 = vmatmul.mubr.bf16.gmra.mxu0 %v441
    %v503 = vpop.f32.mrf.mxu0
    %v504 = vadd.f32 0.0, %v503
    %v505 = vpop.f32.mrf.mxu0
    %v506 = vpop.f32.mrf.mxu0
    %v507 = vadd.f32 0.0, %v506
    %v508 = vpop.f32.mrf.mxu0
    %509 = vmatprep.mubr.bf16.mxu0 0
    %510 = vmatmul.mubr.bf16.gmra.mxu0 %v444
    %v511 = vpop.f32.mrf.mxu0
    %v512 = vadd.f32 0.0, %v511
    %v513 = vpop.f32.mrf.mxu0
    %v514 = vpop.f32.mrf.mxu0
    %v515 = vadd.f32 0.0, %v514
    %v516 = vpop.f32.mrf.mxu0
    %517 = vmatprep.mubr.bf16.mxu0 0
    %518 = vmatmul.mubr.bf16.gmra.mxu0 %v447
    %v519 = vpop.f32.mrf.mxu0
    %v520 = vadd.f32 0.0, %v519
    %v521 = vpop.f32.mrf.mxu0
    %v522 = vpop.f32.mrf.mxu0
    %v523 = vadd.f32 0.0, %v522
    %v524 = vpop.f32.mrf.mxu0
    %525 = vmatprep.mubr.bf16.mxu0 0
    %526 = vmatmul.mubr.bf16.gmra.mxu0 %v450
    %v527 = vpop.f32.mrf.mxu0
    %v528 = vadd.f32 0.0, %v527
    %v529 = vpop.f32.mrf.mxu0
    %v530 = vpop.f32.mrf.mxu0
    %v531 = vadd.f32 0.0, %v530
    %v532 = vpop.f32.mrf.mxu0
    %533 = vmatprep.mubr.bf16.mxu0 0
    %534 = vmatmul.mubr.bf16.gmra.mxu0 %v453
    %v535 = vpop.f32.mrf.mxu0
    %v536 = vadd.f32 0.0, %v535
    %v537 = vpop.f32.mrf.mxu0
    %v538 = vpop.f32.mrf.mxu0
    %v539 = vadd.f32 0.0, %v538
    %v540 = vpop.f32.mrf.mxu0
    %541 = vmatprep.mubr.bf16.mxu0 0
    %542 = vmatmul.mubr.bf16.gmra.mxu0 %v456
    %v543 = vpop.f32.mrf.mxu0
    %v544 = vadd.f32 0.0, %v543
    %v545 = vpop.f32.mrf.mxu0
    %v546 = vpop.f32.mrf.mxu0
    %v547 = vadd.f32 0.0, %v546
    %v548 = vpop.f32.mrf.mxu0
    %549 = vmatprep.mubr.bf16.mxu0 0
    %550 = vmatmul.mubr.bf16.gmra.mxu0 %v459
    %v551 = vpop.f32.mrf.mxu0
    %v552 = vadd.f32 0.0, %v551
    %v553 = vpop.f32.mrf.mxu0
    %v554 = vpop.f32.mrf.mxu0
    %v555 = vadd.f32 0.0, %v554
    %v556 = vpop.f32.mrf.mxu0
    %557 = vdwg.mxu0
    %574 = vrot.lane.b32.xlu0 %v496, 16
    %v575 = vpop.permute.xlu0 %574
    %576 = vrot.lane.b32.xlu0 %v499, 16
    %v577 = vpop.permute.xlu0 %576
    %578 = vrot.lane.b32.xlu0 %v504, 16
    %v579 = vpop.permute.xlu0 %578
    %580 = vrot.lane.b32.xlu0 %v507, 16
    %v581 = vpop.permute.xlu0 %580
    %582 = vrot.lane.b32.xlu0 %v512, 16
    %v583 = vpop.permute.xlu0 %582
    %584 = vrot.lane.b32.xlu0 %v515, 16
    %v585 = vpop.permute.xlu0 %584
    %586 = vrot.lane.b32.xlu0 %v520, 16
    %v587 = vpop.permute.xlu0 %586
    %588 = vrot.lane.b32.xlu0 %v523, 16
    %v589 = vpop.permute.xlu0 %588
    %590 = vrot.lane.b32.xlu0 %v528, 16
    %v591 = vpop.permute.xlu0 %590
    %592 = vrot.lane.b32.xlu0 %v531, 16
    %v593 = vpop.permute.xlu0 %592
    %594 = vrot.lane.b32.xlu0 %v536, 16
    %v595 = vpop.permute.xlu0 %594
    %596 = vrot.lane.b32.xlu0 %v539, 16
    %v597 = vpop.permute.xlu0 %596
    %598 = vrot.lane.b32.xlu0 %v544, 16
    %v599 = vpop.permute.xlu0 %598
    %600 = vrot.lane.b32.xlu0 %v547, 16
    %v601 = vpop.permute.xlu0 %600
    %602 = vrot.lane.b32.xlu0 %v552, 16
    %v603 = vpop.permute.xlu0 %602
    %604 = vrot.lane.b32.xlu0 %v555, 16
    %v605 = vpop.permute.xlu0 %604
    %v622 = vadd.f32 %v269, %v575
    %v623 = vadd.f32 %v272, %v577
    %v624 = vadd.f32 %v277, %v579
    %v625 = vadd.f32 %v280, %v581
    %v626 = vadd.f32 %v285, %v583
    %v627 = vadd.f32 %v288, %v585
    %v628 = vadd.f32 %v293, %v587
    %v629 = vadd.f32 %v296, %v589
    %v630 = vadd.f32 %v301, %v591
    %v631 = vadd.f32 %v304, %v593
    %v632 = vadd.f32 %v309, %v595
    %v633 = vadd.f32 %v312, %v597
    %v634 = vadd.f32 %v317, %v599
    %v635 = vadd.f32 %v320, %v601
    %v636 = vadd.f32 %v325, %v603
    %v637 = vadd.f32 %v328, %v605
    %v638 = vxor.u32 %v622, 2147483648
    %v639 = vxor.u32 %v623, 2147483648
    %v640 = vxor.u32 %v624, 2147483648
    %v641 = vxor.u32 %v625, 2147483648
    %v642 = vxor.u32 %v626, 2147483648
    %v643 = vxor.u32 %v627, 2147483648
    %v644 = vxor.u32 %v628, 2147483648
    %v645 = vxor.u32 %v629, 2147483648
    %v646 = vxor.u32 %v630, 2147483648
    %v647 = vxor.u32 %v631, 2147483648
    %v648 = vxor.u32 %v632, 2147483648
    %v649 = vxor.u32 %v633, 2147483648
    %v650 = vmul.f32 %v638, 1.442695
    %v651 = vpow.pop %v650
    %v652 = vmul.f32 %v639, 1.442695
    %v653 = vpow.pop %v652
    %v654 = vmul.f32 %v640, 1.442695
    %v655 = vpow.pop %v654
    %v656 = vmul.f32 %v641, 1.442695
    %v657 = vpow.pop %v656
    %v658 = vmul.f32 %v642, 1.442695
    %v659 = vpow.pop %v658
    %v660 = vmul.f32 %v643, 1.442695
    %v661 = vpow.pop %v660
    %v662 = vmul.f32 %v644, 1.442695
    %v663 = vpow.pop %v662
    %v664 = vmul.f32 %v645, 1.442695
    %v665 = vpow.pop %v664
    %v666 = vmul.f32 %v646, 1.442695
    %v667 = vpow.pop %v666
    %v668 = vmul.f32 %v647, 1.442695
    %v669 = vpow.pop %v668
    %v670 = vmul.f32 %v648, 1.442695
    %v671 = vpow.pop %v670
    %v672 = vmul.f32 %v649, 1.442695
    %v673 = vpow.pop %v672
    %v674 = vadd.f32 %v651, 1.0
    %v675 = vadd.f32 %v653, 1.0
    %v676 = vadd.f32 %v655, 1.0
    %v677 = vadd.f32 %v657, 1.0
    %v678 = vadd.f32 %v659, 1.0
    %v679 = vadd.f32 %v661, 1.0
    %v680 = vadd.f32 %v663, 1.0
    %v681 = vadd.f32 %v665, 1.0
    %v682 = vadd.f32 %v667, 1.0
    %v683 = vadd.f32 %v669, 1.0
    %v684 = vadd.f32 %v671, 1.0
    %v685 = vadd.f32 %v673, 1.0
    %v686 = vrcp.pop %v674
    %v687 = vmul.f32 1.0, %v686
    %v688 = vrcp.pop %v675
    %v689 = vmul.f32 1.0, %v688
    %v690 = vrcp.pop %v676
    %v691 = vmul.f32 1.0, %v690
    %v692 = vrcp.pop %v677
    %v693 = vmul.f32 1.0, %v692
    %v694 = vrcp.pop %v678
    %v695 = vmul.f32 1.0, %v694
    %v696 = vrcp.pop %v679
    %v697 = vmul.f32 1.0, %v696
    %v698 = vrcp.pop %v680
    %v699 = vmul.f32 1.0, %v698
    %v700 = vrcp.pop %v681
    %v701 = vmul.f32 1.0, %v700
    %v702 = vrcp.pop %v682
    %v703 = vmul.f32 1.0, %v702
    %v704 = vrcp.pop %v683
    %v705 = vmul.f32 1.0, %v704
    %v706 = vrcp.pop %v684
    %v707 = vmul.f32 1.0, %v706
    %v708 = vrcp.pop %v685
    %v709 = vmul.f32 1.0, %v708
    %v710 = vtanh.pop %v634
    %v711 = vtanh.pop %v635
    %v712 = vtanh.pop %v636
    %v713 = vtanh.pop %v637
    %718 = vrot.lane.b32.xlu0 %v383, 16
    %v719 = vpop.permute.xlu0 %718
    %720 = vrot.lane.b32.xlu0 %v384, 16
    %v721 = vpop.permute.xlu0 %720
    %722 = vrot.lane.b32.xlu0 %v385, 16
    %v723 = vpop.permute.xlu0 %722
    %724 = vrot.lane.b32.xlu0 %v386, 16
    %v725 = vpop.permute.xlu0 %724
    %v730 = vmul.f32 %v695, %v719
    %v731 = vmul.f32 %v697, %v721
    %v732 = vmul.f32 %v699, %v723
    %v733 = vmul.f32 %v701, %v725
    %v734 = vmul.f32 %v687, %v710
    %v735 = vmul.f32 %v689, %v711
    %v736 = vmul.f32 %v691, %v712
    %v737 = vmul.f32 %v693, %v713
    %v738 = vadd.f32 %v730, %v734
    %v739 = vadd.f32 %v731, %v735
    %v740 = vadd.f32 %v732, %v736
    %v741 = vadd.f32 %v733, %v737
    %v742 = vtanh.pop %v738
    %v743 = vtanh.pop %v739
    %v744 = vtanh.pop %v740
    %v745 = vtanh.pop %v741
    %v746 = vmul.f32 %v703, %v742
    %v747 = vmul.f32 %v705, %v743
    %v748 = vmul.f32 %v707, %v744
    %v749 = vmul.f32 %v709, %v745
    %v750 = vpack.c.bf16 %v747, %v746
    %v751 = vpack.c.bf16 %v749, %v748
    %754 = vrot.lane.b32.xlu0 %v750, 112
    %v755 = vpop.permute.xlu0 %754
    %756 = vrot.lane.b32.xlu0 %v751, 112
    %v757 = vpop.permute.xlu0 %756
    %760 = vmatprep.subr.bf16.mxu0 0
    %761 = vmatpush1.bf16.msra.mxu0 0
    %762 = vmatprep.subr.bf16.mxu0 0
    %763 = vmatpush1.bf16.msra.mxu0 0
    %764 = vmatprep.subr.bf16.mxu0 0
    %765 = vmatpush1.bf16.msra.mxu0 0
    %766 = vmatprep.subr.bf16.mxu0 0
    %767 = vmatpush1.bf16.msra.mxu0 0
    %768 = vmatprep.subr.bf16.mxu0 0
    %769 = vmatpush1.bf16.msra.mxu0 0
    %770 = vmatprep.subr.bf16.mxu0 0
    %771 = vmatpush1.bf16.msra.mxu0 0
    %772 = vmatprep.subr.bf16.mxu0 0
    %773 = vmatpush1.bf16.msra.mxu0 %v757
    %774 = vmatprep.subr.bf16.mxu0 0
    %775 = vmatpush1.bf16.msra.mxu0 %v755
    %776 = vmatprep.subr.bf16.mxu0 0
    %777 = vmatpush2.bf16.msra.mxu0 0
    %778 = vmatprep.subr.bf16.mxu0 0
    %779 = vmatpush2.bf16.msra.mxu0 0
    %780 = vmatprep.subr.bf16.mxu0 0
    %781 = vmatpush2.bf16.msra.mxu0 0
    %782 = vmatprep.subr.bf16.mxu0 0
    %783 = vmatpush2.bf16.msra.mxu0 0
    %784 = vmatprep.subr.bf16.mxu0 0
    %785 = vmatpush2.bf16.msra.mxu0 0
    %786 = vmatprep.subr.bf16.mxu0 0
    %787 = vmatpush2.bf16.msra.mxu0 0
    %788 = vmatprep.subr.bf16.mxu0 0
    %789 = vmatpush2.bf16.msra.mxu0 0
    %790 = vmatprep.subr.bf16.mxu0 0
    %791 = vmatpush2.bf16.msra.mxu0 0
    %792 = vmatprep.mubr.bf16.mxu0 0
    %793 = vmatmul.mubr.bf16.gmra.mxu0 %v438
    %v794 = vpop.f32.mrf.mxu0
    %v795 = vadd.f32 0.0, %v794
    %v796 = vpop.f32.mrf.mxu0
    %v797 = vpop.f32.mrf.mxu0
    %v798 = vadd.f32 0.0, %v797
    %v799 = vpop.f32.mrf.mxu0
    %800 = vmatprep.mubr.bf16.mxu0 0
    %801 = vmatmul.mubr.bf16.gmra.mxu0 %v441
    %v802 = vpop.f32.mrf.mxu0
    %v803 = vadd.f32 0.0, %v802
    %v804 = vpop.f32.mrf.mxu0
    %v805 = vpop.f32.mrf.mxu0
    %v806 = vadd.f32 0.0, %v805
    %v807 = vpop.f32.mrf.mxu0
    %808 = vmatprep.mubr.bf16.mxu0 0
    %809 = vmatmul.mubr.bf16.gmra.mxu0 %v444
    %v810 = vpop.f32.mrf.mxu0
    %v811 = vadd.f32 0.0, %v810
    %v812 = vpop.f32.mrf.mxu0
    %v813 = vpop.f32.mrf.mxu0
    %v814 = vadd.f32 0.0, %v813
    %v815 = vpop.f32.mrf.mxu0
    %816 = vmatprep.mubr.bf16.mxu0 0
    %817 = vmatmul.mubr.bf16.gmra.mxu0 %v447
    %v818 = vpop.f32.mrf.mxu0
    %v819 = vadd.f32 0.0, %v818
    %v820 = vpop.f32.mrf.mxu0
    %v821 = vpop.f32.mrf.mxu0
    %v822 = vadd.f32 0.0, %v821
    %v823 = vpop.f32.mrf.mxu0
    %824 = vmatprep.mubr.bf16.mxu0 0
    %825 = vmatmul.mubr.bf16.gmra.mxu0 %v450
    %v826 = vpop.f32.mrf.mxu0
    %v827 = vadd.f32 0.0, %v826
    %v828 = vpop.f32.mrf.mxu0
    %v829 = vpop.f32.mrf.mxu0
    %v830 = vadd.f32 0.0, %v829
    %v831 = vpop.f32.mrf.mxu0
    %832 = vmatprep.mubr.bf16.mxu0 0
    %833 = vmatmul.mubr.bf16.gmra.mxu0 %v453
    %v834 = vpop.f32.mrf.mxu0
    %v835 = vadd.f32 0.0, %v834
    %v836 = vpop.f32.mrf.mxu0
    %v837 = vpop.f32.mrf.mxu0
    %v838 = vadd.f32 0.0, %v837
    %v839 = vpop.f32.mrf.mxu0
    %840 = vmatprep.mubr.bf16.mxu0 0
    %841 = vmatmul.mubr.bf16.gmra.mxu0 %v456
    %v842 = vpop.f32.mrf.mxu0
    %v843 = vadd.f32 0.0, %v842
    %v844 = vpop.f32.mrf.mxu0
    %v845 = vpop.f32.mrf.mxu0
    %v846 = vadd.f32 0.0, %v845
    %v847 = vpop.f32.mrf.mxu0
    %848 = vmatprep.mubr.bf16.mxu0 0
    %849 = vmatmul.mubr.bf16.gmra.mxu0 %v459
    %v850 = vpop.f32.mrf.mxu0
    %v851 = vadd.f32 0.0, %v850
    %v852 = vpop.f32.mrf.mxu0
    %v853 = vpop.f32.mrf.mxu0
    %v854 = vadd.f32 0.0, %v853
    %v855 = vpop.f32.mrf.mxu0
    %856 = vdwg.mxu0
    %873 = vrot.lane.b32.xlu0 %v795, 32
    %v874 = vpop.permute.xlu0 %873
    %875 = vrot.lane.b32.xlu0 %v798, 32
    %v876 = vpop.permute.xlu0 %875
    %877 = vrot.lane.b32.xlu0 %v803, 32
    %v878 = vpop.permute.xlu0 %877
    %879 = vrot.lane.b32.xlu0 %v806, 32
    %v880 = vpop.permute.xlu0 %879
    %881 = vrot.lane.b32.xlu0 %v811, 32
    %v882 = vpop.permute.xlu0 %881
    %883 = vrot.lane.b32.xlu0 %v814, 32
    %v884 = vpop.permute.xlu0 %883
    %885 = vrot.lane.b32.xlu0 %v819, 32
    %v886 = vpop.permute.xlu0 %885
    %887 = vrot.lane.b32.xlu0 %v822, 32
    %v888 = vpop.permute.xlu0 %887
    %889 = vrot.lane.b32.xlu0 %v827, 32
    %v890 = vpop.permute.xlu0 %889
    %891 = vrot.lane.b32.xlu0 %v830, 32
    %v892 = vpop.permute.xlu0 %891
    %893 = vrot.lane.b32.xlu0 %v835, 32
    %v894 = vpop.permute.xlu0 %893
    %895 = vrot.lane.b32.xlu0 %v838, 32
    %v896 = vpop.permute.xlu0 %895
    %897 = vrot.lane.b32.xlu0 %v843, 32
    %v898 = vpop.permute.xlu0 %897
    %899 = vrot.lane.b32.xlu0 %v846, 32
    %v900 = vpop.permute.xlu0 %899
    %901 = vrot.lane.b32.xlu0 %v851, 32
    %v902 = vpop.permute.xlu0 %901
    %903 = vrot.lane.b32.xlu0 %v854, 32
    %v904 = vpop.permute.xlu0 %903
    %v921 = vadd.f32 %v269, %v874
    %v922 = vadd.f32 %v272, %v876
    %v923 = vadd.f32 %v277, %v878
    %v924 = vadd.f32 %v280, %v880
    %v925 = vadd.f32 %v285, %v882
    %v926 = vadd.f32 %v288, %v884
    %v927 = vadd.f32 %v293, %v886
    %v928 = vadd.f32 %v296, %v888
    %v929 = vadd.f32 %v301, %v890
    %v930 = vadd.f32 %v304, %v892
    %v931 = vadd.f32 %v309, %v894
    %v932 = vadd.f32 %v312, %v896
    %v933 = vadd.f32 %v317, %v898
    %v934 = vadd.f32 %v320, %v900
    %v935 = vadd.f32 %v325, %v902
    %v936 = vadd.f32 %v328, %v904
    %v937 = vxor.u32 %v921, 2147483648
    %v938 = vxor.u32 %v922, 2147483648
    %v939 = vxor.u32 %v923, 2147483648
    %v940 = vxor.u32 %v924, 2147483648
    %v941 = vxor.u32 %v925, 2147483648
    %v942 = vxor.u32 %v926, 2147483648
    %v943 = vxor.u32 %v927, 2147483648
    %v944 = vxor.u32 %v928, 2147483648
    %v945 = vxor.u32 %v929, 2147483648
    %v946 = vxor.u32 %v930, 2147483648
    %v947 = vxor.u32 %v931, 2147483648
    %v948 = vxor.u32 %v932, 2147483648
    %v949 = vmul.f32 %v937, 1.442695
    %v950 = vpow.pop %v949
    %v951 = vmul.f32 %v938, 1.442695
    %v952 = vpow.pop %v951
    %v953 = vmul.f32 %v939, 1.442695
    %v954 = vpow.pop %v953
    %v955 = vmul.f32 %v940, 1.442695
    %v956 = vpow.pop %v955
    %v957 = vmul.f32 %v941, 1.442695
    %v958 = vpow.pop %v957
    %v959 = vmul.f32 %v942, 1.442695
    %v960 = vpow.pop %v959
    %v961 = vmul.f32 %v943, 1.442695
    %v962 = vpow.pop %v961
    %v963 = vmul.f32 %v944, 1.442695
    %v964 = vpow.pop %v963
    %v965 = vmul.f32 %v945, 1.442695
    %v966 = vpow.pop %v965
    %v967 = vmul.f32 %v946, 1.442695
    %v968 = vpow.pop %v967
    %v969 = vmul.f32 %v947, 1.442695
    %v970 = vpow.pop %v969
    %v971 = vmul.f32 %v948, 1.442695
    %v972 = vpow.pop %v971
    %v973 = vadd.f32 %v950, 1.0
    %v974 = vadd.f32 %v952, 1.0
    %v975 = vadd.f32 %v954, 1.0
    %v976 = vadd.f32 %v956, 1.0
    %v977 = vadd.f32 %v958, 1.0
    %v978 = vadd.f32 %v960, 1.0
    %v979 = vadd.f32 %v962, 1.0
    %v980 = vadd.f32 %v964, 1.0
    %v981 = vadd.f32 %v966, 1.0
    %v982 = vadd.f32 %v968, 1.0
    %v983 = vadd.f32 %v970, 1.0
    %v984 = vadd.f32 %v972, 1.0
    %v985 = vrcp.pop %v973
    %v986 = vmul.f32 1.0, %v985
    %v987 = vrcp.pop %v974
    %v988 = vmul.f32 1.0, %v987
    %v989 = vrcp.pop %v975
    %v990 = vmul.f32 1.0, %v989
    %v991 = vrcp.pop %v976
    %v992 = vmul.f32 1.0, %v991
    %v993 = vrcp.pop %v977
    %v994 = vmul.f32 1.0, %v993
    %v995 = vrcp.pop %v978
    %v996 = vmul.f32 1.0, %v995
    %v997 = vrcp.pop %v979
    %v998 = vmul.f32 1.0, %v997
    %v999 = vrcp.pop %v980
    %v1000 = vmul.f32 1.0, %v999
    %v1001 = vrcp.pop %v981
    %v1002 = vmul.f32 1.0, %v1001
    %v1003 = vrcp.pop %v982
    %v1004 = vmul.f32 1.0, %v1003
    %v1005 = vrcp.pop %v983
    %v1006 = vmul.f32 1.0, %v1005
    %v1007 = vrcp.pop %v984
    %v1008 = vmul.f32 1.0, %v1007
    %v1009 = vtanh.pop %v933
    %v1010 = vtanh.pop %v934
    %v1011 = vtanh.pop %v935
    %v1012 = vtanh.pop %v936
    %1017 = vrot.lane.b32.xlu0 %v738, 16
    %v1018 = vpop.permute.xlu0 %1017
    %1019 = vrot.lane.b32.xlu0 %v739, 16
    %v1020 = vpop.permute.xlu0 %1019
    %1021 = vrot.lane.b32.xlu0 %v740, 16
    %v1022 = vpop.permute.xlu0 %1021
    %1023 = vrot.lane.b32.xlu0 %v741, 16
    %v1024 = vpop.permute.xlu0 %1023
    %v1029 = vmul.f32 %v994, %v1018
    %v1030 = vmul.f32 %v996, %v1020
    %v1031 = vmul.f32 %v998, %v1022
    %v1032 = vmul.f32 %v1000, %v1024
    %v1033 = vmul.f32 %v986, %v1009
    %v1034 = vmul.f32 %v988, %v1010
    %v1035 = vmul.f32 %v990, %v1011
    %v1036 = vmul.f32 %v992, %v1012
    %v1037 = vadd.f32 %v1029, %v1033
    %v1038 = vadd.f32 %v1030, %v1034
    %v1039 = vadd.f32 %v1031, %v1035
    %v1040 = vadd.f32 %v1032, %v1036
    %v1041 = vtanh.pop %v1037
    %v1042 = vtanh.pop %v1038
    %v1043 = vtanh.pop %v1039
    %v1044 = vtanh.pop %v1040
    %v1045 = vmul.f32 %v1002, %v1041
    %v1046 = vmul.f32 %v1004, %v1042
    %v1047 = vmul.f32 %v1006, %v1043
    %v1048 = vmul.f32 %v1008, %v1044
    %v1049 = vpack.c.bf16 %v1046, %v1045
    %v1050 = vpack.c.bf16 %v1048, %v1047
    %1053 = vrot.lane.b32.xlu0 %v1049, 96
    %v1054 = vpop.permute.xlu0 %1053
    %1055 = vrot.lane.b32.xlu0 %v1050, 96
    %v1056 = vpop.permute.xlu0 %1055
    %1059 = vmatprep.subr.bf16.mxu0 0
    %1060 = vmatpush1.bf16.msra.mxu0 0
    %1061 = vmatprep.subr.bf16.mxu0 0
    %1062 = vmatpush1.bf16.msra.mxu0 0
    %1063 = vmatprep.subr.bf16.mxu0 0
    %1064 = vmatpush1.bf16.msra.mxu0 0
    %1065 = vmatprep.subr.bf16.mxu0 0
    %1066 = vmatpush1.bf16.msra.mxu0 0
    %1067 = vmatprep.subr.bf16.mxu0 0
    %1068 = vmatpush1.bf16.msra.mxu0 0
    %1069 = vmatprep.subr.bf16.mxu0 0
    %1070 = vmatpush1.bf16.msra.mxu0 0
    %1071 = vmatprep.subr.bf16.mxu0 0
    %1072 = vmatpush1.bf16.msra.mxu0 %v1056
    %1073 = vmatprep.subr.bf16.mxu0 0
    %1074 = vmatpush1.bf16.msra.mxu0 %v1054
    %1075 = vmatprep.subr.bf16.mxu0 0
    %1076 = vmatpush2.bf16.msra.mxu0 0
    %1077 = vmatprep.subr.bf16.mxu0 0
    %1078 = vmatpush2.bf16.msra.mxu0 0
    %1079 = vmatprep.subr.bf16.mxu0 0
    %1080 = vmatpush2.bf16.msra.mxu0 0
    %1081 = vmatprep.subr.bf16.mxu0 0
    %1082 = vmatpush2.bf16.msra.mxu0 0
    %1083 = vmatprep.subr.bf16.mxu0 0
    %1084 = vmatpush2.bf16.msra.mxu0 0
    %1085 = vmatprep.subr.bf16.mxu0 0
    %1086 = vmatpush2.bf16.msra.mxu0 0
    %1087 = vmatprep.subr.bf16.mxu0 0
    %1088 = vmatpush2.bf16.msra.mxu0 0
    %1089 = vmatprep.subr.bf16.mxu0 0
    %1090 = vmatpush2.bf16.msra.mxu0 0
    %1091 = vmatprep.mubr.bf16.mxu0 0
    %1092 = vmatmul.mubr.bf16.gmra.mxu0 %v438
    %v1093 = vpop.f32.mrf.mxu0
    %v1094 = vadd.f32 0.0, %v1093
    %v1095 = vpop.f32.mrf.mxu0
    %v1096 = vpop.f32.mrf.mxu0
    %v1097 = vadd.f32 0.0, %v1096
    %v1098 = vpop.f32.mrf.mxu0
    %1099 = vmatprep.mubr.bf16.mxu0 0
    %1100 = vmatmul.mubr.bf16.gmra.mxu0 %v441
    %v1101 = vpop.f32.mrf.mxu0
    %v1102 = vadd.f32 0.0, %v1101
    %v1103 = vpop.f32.mrf.mxu0
    %v1104 = vpop.f32.mrf.mxu0
    %v1105 = vadd.f32 0.0, %v1104
    %v1106 = vpop.f32.mrf.mxu0
    %1107 = vmatprep.mubr.bf16.mxu0 0
    %1108 = vmatmul.mubr.bf16.gmra.mxu0 %v444
    %v1109 = vpop.f32.mrf.mxu0
    %v1110 = vadd.f32 0.0, %v1109
    %v1111 = vpop.f32.mrf.mxu0
    %v1112 = vpop.f32.mrf.mxu0
    %v1113 = vadd.f32 0.0, %v1112
    %v1114 = vpop.f32.mrf.mxu0
    %1115 = vmatprep.mubr.bf16.mxu0 0
    %1116 = vmatmul.mubr.bf16.gmra.mxu0 %v447
    %v1117 = vpop.f32.mrf.mxu0
    %v1118 = vadd.f32 0.0, %v1117
    %v1119 = vpop.f32.mrf.mxu0
    %v1120 = vpop.f32.mrf.mxu0
    %v1121 = vadd.f32 0.0, %v1120
    %v1122 = vpop.f32.mrf.mxu0
    %1123 = vmatprep.mubr.bf16.mxu0 0
    %1124 = vmatmul.mubr.bf16.gmra.mxu0 %v450
    %v1125 = vpop.f32.mrf.mxu0
    %v1126 = vadd.f32 0.0, %v1125
    %v1127 = vpop.f32.mrf.mxu0
    %v1128 = vpop.f32.mrf.mxu0
    %v1129 = vadd.f32 0.0, %v1128
    %v1130 = vpop.f32.mrf.mxu0
    %1131 = vmatprep.mubr.bf16.mxu0 0
    %1132 = vmatmul.mubr.bf16.gmra.mxu0 %v453
    %v1133 = vpop.f32.mrf.mxu0
    %v1134 = vadd.f32 0.0, %v1133
    %v1135 = vpop.f32.mrf.mxu0
    %v1136 = vpop.f32.mrf.mxu0
    %v1137 = vadd.f32 0.0, %v1136
    %v1138 = vpop.f32.mrf.mxu0
    %1139 = vmatprep.mubr.bf16.mxu0 0
    %1140 = vmatmul.mubr.bf16.gmra.mxu0 %v456
    %v1141 = vpop.f32.mrf.mxu0
    %v1142 = vadd.f32 0.0, %v1141
    %v1143 = vpop.f32.mrf.mxu0
    %v1144 = vpop.f32.mrf.mxu0
    %v1145 = vadd.f32 0.0, %v1144
    %v1146 = vpop.f32.mrf.mxu0
    %1147 = vmatprep.mubr.bf16.mxu0 0
    %1148 = vmatmul.mubr.bf16.gmra.mxu0 %v459
    %v1149 = vpop.f32.mrf.mxu0
    %v1150 = vadd.f32 0.0, %v1149
    %v1151 = vpop.f32.mrf.mxu0
    %v1152 = vpop.f32.mrf.mxu0
    %v1153 = vadd.f32 0.0, %v1152
    %v1154 = vpop.f32.mrf.mxu0
    %1155 = vdwg.mxu0
    %1172 = vrot.lane.b32.xlu0 %v1094, 48
    %v1173 = vpop.permute.xlu0 %1172
    %1174 = vrot.lane.b32.xlu0 %v1097, 48
    %v1175 = vpop.permute.xlu0 %1174
    %1176 = vrot.lane.b32.xlu0 %v1102, 48
    %v1177 = vpop.permute.xlu0 %1176
    %1178 = vrot.lane.b32.xlu0 %v1105, 48
    %v1179 = vpop.permute.xlu0 %1178
    %1180 = vrot.lane.b32.xlu0 %v1110, 48
    %v1181 = vpop.permute.xlu0 %1180
    %1182 = vrot.lane.b32.xlu0 %v1113, 48
    %v1183 = vpop.permute.xlu0 %1182
    %1184 = vrot.lane.b32.xlu0 %v1118, 48
    %v1185 = vpop.permute.xlu0 %1184
    %1186 = vrot.lane.b32.xlu0 %v1121, 48
    %v1187 = vpop.permute.xlu0 %1186
    %1188 = vrot.lane.b32.xlu0 %v1126, 48
    %v1189 = vpop.permute.xlu0 %1188
    %1190 = vrot.lane.b32.xlu0 %v1129, 48
    %v1191 = vpop.permute.xlu0 %1190
    %1192 = vrot.lane.b32.xlu0 %v1134, 48
    %v1193 = vpop.permute.xlu0 %1192
    %1194 = vrot.lane.b32.xlu0 %v1137, 48
    %v1195 = vpop.permute.xlu0 %1194
    %1196 = vrot.lane.b32.xlu0 %v1142, 48
    %v1197 = vpop.permute.xlu0 %1196
    %1198 = vrot.lane.b32.xlu0 %v1145, 48
    %v1199 = vpop.permute.xlu0 %1198
    %1200 = vrot.lane.b32.xlu0 %v1150, 48
    %v1201 = vpop.permute.xlu0 %1200
    %1202 = vrot.lane.b32.xlu0 %v1153, 48
    %v1203 = vpop.permute.xlu0 %1202
    %v1220 = vadd.f32 %v269, %v1173
    %v1221 = vadd.f32 %v272, %v1175
    %v1222 = vadd.f32 %v277, %v1177
    %v1223 = vadd.f32 %v280, %v1179
    %v1224 = vadd.f32 %v285, %v1181
    %v1225 = vadd.f32 %v288, %v1183
    %v1226 = vadd.f32 %v293, %v1185
    %v1227 = vadd.f32 %v296, %v1187
    %v1228 = vadd.f32 %v301, %v1189
    %v1229 = vadd.f32 %v304, %v1191
    %v1230 = vadd.f32 %v309, %v1193
    %v1231 = vadd.f32 %v312, %v1195
    %v1232 = vadd.f32 %v317, %v1197
    %v1233 = vadd.f32 %v320, %v1199
    %v1234 = vadd.f32 %v325, %v1201
    %v1235 = vadd.f32 %v328, %v1203
    %v1236 = vxor.u32 %v1220, 2147483648
    %v1237 = vxor.u32 %v1221, 2147483648
    %v1238 = vxor.u32 %v1222, 2147483648
    %v1239 = vxor.u32 %v1223, 2147483648
    %v1240 = vxor.u32 %v1224, 2147483648
    %v1241 = vxor.u32 %v1225, 2147483648
    %v1242 = vxor.u32 %v1226, 2147483648
    %v1243 = vxor.u32 %v1227, 2147483648
    %v1244 = vxor.u32 %v1228, 2147483648
    %v1245 = vxor.u32 %v1229, 2147483648
    %v1246 = vxor.u32 %v1230, 2147483648
    %v1247 = vxor.u32 %v1231, 2147483648
    %v1248 = vmul.f32 %v1236, 1.442695
    %v1249 = vpow.pop %v1248
    %v1250 = vmul.f32 %v1237, 1.442695
    %v1251 = vpow.pop %v1250
    %v1252 = vmul.f32 %v1238, 1.442695
    %v1253 = vpow.pop %v1252
    %v1254 = vmul.f32 %v1239, 1.442695
    %v1255 = vpow.pop %v1254
    %v1256 = vmul.f32 %v1240, 1.442695
    %v1257 = vpow.pop %v1256
    %v1258 = vmul.f32 %v1241, 1.442695
    %v1259 = vpow.pop %v1258
    %v1260 = vmul.f32 %v1242, 1.442695
    %v1261 = vpow.pop %v1260
    %v1262 = vmul.f32 %v1243, 1.442695
    %v1263 = vpow.pop %v1262
    %v1264 = vmul.f32 %v1244, 1.442695
    %v1265 = vpow.pop %v1264
    %v1266 = vmul.f32 %v1245, 1.442695
    %v1267 = vpow.pop %v1266
    %v1268 = vmul.f32 %v1246, 1.442695
    %v1269 = vpow.pop %v1268
    %v1270 = vmul.f32 %v1247, 1.442695
    %v1271 = vpow.pop %v1270
    %v1272 = vadd.f32 %v1249, 1.0
    %v1273 = vadd.f32 %v1251, 1.0
    %v1274 = vadd.f32 %v1253, 1.0
    %v1275 = vadd.f32 %v1255, 1.0
    %v1276 = vadd.f32 %v1257, 1.0
    %v1277 = vadd.f32 %v1259, 1.0
    %v1278 = vadd.f32 %v1261, 1.0
    %v1279 = vadd.f32 %v1263, 1.0
    %v1280 = vadd.f32 %v1265, 1.0
    %v1281 = vadd.f32 %v1267, 1.0
    %v1282 = vadd.f32 %v1269, 1.0
    %v1283 = vadd.f32 %v1271, 1.0
    %v1284 = vrcp.pop %v1272
    %v1285 = vmul.f32 1.0, %v1284
    %v1286 = vrcp.pop %v1273
    %v1287 = vmul.f32 1.0, %v1286
    %v1288 = vrcp.pop %v1274
    %v1289 = vmul.f32 1.0, %v1288
    %v1290 = vrcp.pop %v1275
    %v1291 = vmul.f32 1.0, %v1290
    %v1292 = vrcp.pop %v1276
    %v1293 = vmul.f32 1.0, %v1292
    %v1294 = vrcp.pop %v1277
    %v1295 = vmul.f32 1.0, %v1294
    %v1296 = vrcp.pop %v1278
    %v1297 = vmul.f32 1.0, %v1296
    %v1298 = vrcp.pop %v1279
    %v1299 = vmul.f32 1.0, %v1298
    %v1300 = vrcp.pop %v1280
    %v1301 = vmul.f32 1.0, %v1300
    %v1302 = vrcp.pop %v1281
    %v1303 = vmul.f32 1.0, %v1302
    %v1304 = vrcp.pop %v1282
    %v1305 = vmul.f32 1.0, %v1304
    %v1306 = vrcp.pop %v1283
    %v1307 = vmul.f32 1.0, %v1306
    %v1308 = vtanh.pop %v1232
    %v1309 = vtanh.pop %v1233
    %v1310 = vtanh.pop %v1234
    %v1311 = vtanh.pop %v1235
    %1316 = vrot.lane.b32.xlu0 %v1037, 16
    %v1317 = vpop.permute.xlu0 %1316
    %1318 = vrot.lane.b32.xlu0 %v1038, 16
    %v1319 = vpop.permute.xlu0 %1318
    %1320 = vrot.lane.b32.xlu0 %v1039, 16
    %v1321 = vpop.permute.xlu0 %1320
    %1322 = vrot.lane.b32.xlu0 %v1040, 16
    %v1323 = vpop.permute.xlu0 %1322
    %v1328 = vmul.f32 %v1293, %v1317
    %v1329 = vmul.f32 %v1295, %v1319
    %v1330 = vmul.f32 %v1297, %v1321
    %v1331 = vmul.f32 %v1299, %v1323
    %v1332 = vmul.f32 %v1285, %v1308
    %v1333 = vmul.f32 %v1287, %v1309
    %v1334 = vmul.f32 %v1289, %v1310
    %v1335 = vmul.f32 %v1291, %v1311
    %v1336 = vadd.f32 %v1328, %v1332
    %v1337 = vadd.f32 %v1329, %v1333
    %v1338 = vadd.f32 %v1330, %v1334
    %v1339 = vadd.f32 %v1331, %v1335
    %v1340 = vtanh.pop %v1336
    %v1341 = vtanh.pop %v1337
    %v1342 = vtanh.pop %v1338
    %v1343 = vtanh.pop %v1339
    %v1344 = vmul.f32 %v1301, %v1340
    %v1345 = vmul.f32 %v1303, %v1341
    %v1346 = vmul.f32 %v1305, %v1342
    %v1347 = vmul.f32 %v1307, %v1343
    %v1348 = vpack.c.bf16 %v1345, %v1344
    %v1349 = vpack.c.bf16 %v1347, %v1346
    %1352 = vrot.lane.b32.xlu0 %v1348, 80
    %v1353 = vpop.permute.xlu0 %1352
    %1354 = vrot.lane.b32.xlu0 %v1349, 80
    %v1355 = vpop.permute.xlu0 %1354
    %1358 = vmatprep.subr.bf16.mxu0 0
    %1359 = vmatpush1.bf16.msra.mxu0 0
    %1360 = vmatprep.subr.bf16.mxu0 0
    %1361 = vmatpush1.bf16.msra.mxu0 0
    %1362 = vmatprep.subr.bf16.mxu0 0
    %1363 = vmatpush1.bf16.msra.mxu0 0
    %1364 = vmatprep.subr.bf16.mxu0 0
    %1365 = vmatpush1.bf16.msra.mxu0 0
    %1366 = vmatprep.subr.bf16.mxu0 0
    %1367 = vmatpush1.bf16.msra.mxu0 0
    %1368 = vmatprep.subr.bf16.mxu0 0
    %1369 = vmatpush1.bf16.msra.mxu0 0
    %1370 = vmatprep.subr.bf16.mxu0 0
    %1371 = vmatpush1.bf16.msra.mxu0 %v1355
    %1372 = vmatprep.subr.bf16.mxu0 0
    %1373 = vmatpush1.bf16.msra.mxu0 %v1353
    %1374 = vmatprep.subr.bf16.mxu0 0
    %1375 = vmatpush2.bf16.msra.mxu0 0
    %1376 = vmatprep.subr.bf16.mxu0 0
    %1377 = vmatpush2.bf16.msra.mxu0 0
    %1378 = vmatprep.subr.bf16.mxu0 0
    %1379 = vmatpush2.bf16.msra.mxu0 0
    %1380 = vmatprep.subr.bf16.mxu0 0
    %1381 = vmatpush2.bf16.msra.mxu0 0
    %1382 = vmatprep.subr.bf16.mxu0 0
    %1383 = vmatpush2.bf16.msra.mxu0 0
    %1384 = vmatprep.subr.bf16.mxu0 0
    %1385 = vmatpush2.bf16.msra.mxu0 0
    %1386 = vmatprep.subr.bf16.mxu0 0
    %1387 = vmatpush2.bf16.msra.mxu0 0
    %1388 = vmatprep.subr.bf16.mxu0 0
    %1389 = vmatpush2.bf16.msra.mxu0 0
    %1390 = vmatprep.mubr.bf16.mxu0 0
    %1391 = vmatmul.mubr.bf16.gmra.mxu0 %v438
    %v1392 = vpop.f32.mrf.mxu0
    %v1393 = vadd.f32 0.0, %v1392
    %v1394 = vpop.f32.mrf.mxu0
    %v1395 = vpop.f32.mrf.mxu0
    %v1396 = vadd.f32 0.0, %v1395
    %v1397 = vpop.f32.mrf.mxu0
    %1398 = vmatprep.mubr.bf16.mxu0 0
    %1399 = vmatmul.mubr.bf16.gmra.mxu0 %v441
    %v1400 = vpop.f32.mrf.mxu0
    %v1401 = vadd.f32 0.0, %v1400
    %v1402 = vpop.f32.mrf.mxu0
    %v1403 = vpop.f32.mrf.mxu0
    %v1404 = vadd.f32 0.0, %v1403
    %v1405 = vpop.f32.mrf.mxu0
    %1406 = vmatprep.mubr.bf16.mxu0 0
    %1407 = vmatmul.mubr.bf16.gmra.mxu0 %v444
    %v1408 = vpop.f32.mrf.mxu0
    %v1409 = vadd.f32 0.0, %v1408
    %v1410 = vpop.f32.mrf.mxu0
    %v1411 = vpop.f32.mrf.mxu0
    %v1412 = vadd.f32 0.0, %v1411
    %v1413 = vpop.f32.mrf.mxu0
    %1414 = vmatprep.mubr.bf16.mxu0 0
    %1415 = vmatmul.mubr.bf16.gmra.mxu0 %v447
    %v1416 = vpop.f32.mrf.mxu0
    %v1417 = vadd.f32 0.0, %v1416
    %v1418 = vpop.f32.mrf.mxu0
    %v1419 = vpop.f32.mrf.mxu0
    %v1420 = vadd.f32 0.0, %v1419
    %v1421 = vpop.f32.mrf.mxu0
    %1422 = vmatprep.mubr.bf16.mxu0 0
    %1423 = vmatmul.mubr.bf16.gmra.mxu0 %v450
    %v1424 = vpop.f32.mrf.mxu0
    %v1425 = vadd.f32 0.0, %v1424
    %v1426 = vpop.f32.mrf.mxu0
    %v1427 = vpop.f32.mrf.mxu0
    %v1428 = vadd.f32 0.0, %v1427
    %v1429 = vpop.f32.mrf.mxu0
    %1430 = vmatprep.mubr.bf16.mxu0 0
    %1431 = vmatmul.mubr.bf16.gmra.mxu0 %v453
    %v1432 = vpop.f32.mrf.mxu0
    %v1433 = vadd.f32 0.0, %v1432
    %v1434 = vpop.f32.mrf.mxu0
    %v1435 = vpop.f32.mrf.mxu0
    %v1436 = vadd.f32 0.0, %v1435
    %v1437 = vpop.f32.mrf.mxu0
    %1438 = vmatprep.mubr.bf16.mxu0 0
    %1439 = vmatmul.mubr.bf16.gmra.mxu0 %v456
    %v1440 = vpop.f32.mrf.mxu0
    %v1441 = vadd.f32 0.0, %v1440
    %v1442 = vpop.f32.mrf.mxu0
    %v1443 = vpop.f32.mrf.mxu0
    %v1444 = vadd.f32 0.0, %v1443
    %v1445 = vpop.f32.mrf.mxu0
    %1446 = vmatprep.mubr.bf16.mxu0 0
    %1447 = vmatmul.mubr.bf16.gmra.mxu0 %v459
    %v1448 = vpop.f32.mrf.mxu0
    %v1449 = vadd.f32 0.0, %v1448
    %v1450 = vpop.f32.mrf.mxu0
    %v1451 = vpop.f32.mrf.mxu0
    %v1452 = vadd.f32 0.0, %v1451
    %v1453 = vpop.f32.mrf.mxu0
    %1454 = vdwg.mxu0
    %1471 = vrot.lane.b32.xlu0 %v1393, 64
    %v1472 = vpop.permute.xlu0 %1471
    %1473 = vrot.lane.b32.xlu0 %v1396, 64
    %v1474 = vpop.permute.xlu0 %1473
    %1475 = vrot.lane.b32.xlu0 %v1401, 64
    %v1476 = vpop.permute.xlu0 %1475
    %1477 = vrot.lane.b32.xlu0 %v1404, 64
    %v1478 = vpop.permute.xlu0 %1477
    %1479 = vrot.lane.b32.xlu0 %v1409, 64
    %v1480 = vpop.permute.xlu0 %1479
    %1481 = vrot.lane.b32.xlu0 %v1412, 64
    %v1482 = vpop.permute.xlu0 %1481
    %1483 = vrot.lane.b32.xlu0 %v1417, 64
    %v1484 = vpop.permute.xlu0 %1483
    %1485 = vrot.lane.b32.xlu0 %v1420, 64
    %v1486 = vpop.permute.xlu0 %1485
    %1487 = vrot.lane.b32.xlu0 %v1425, 64
    %v1488 = vpop.permute.xlu0 %1487
    %1489 = vrot.lane.b32.xlu0 %v1428, 64
    %v1490 = vpop.permute.xlu0 %1489
    %1491 = vrot.lane.b32.xlu0 %v1433, 64
    %v1492 = vpop.permute.xlu0 %1491
    %1493 = vrot.lane.b32.xlu0 %v1436, 64
    %v1494 = vpop.permute.xlu0 %1493
    %1495 = vrot.lane.b32.xlu0 %v1441, 64
    %v1496 = vpop.permute.xlu0 %1495
    %1497 = vrot.lane.b32.xlu0 %v1444, 64
    %v1498 = vpop.permute.xlu0 %1497
    %1499 = vrot.lane.b32.xlu0 %v1449, 64
    %v1500 = vpop.permute.xlu0 %1499
    %1501 = vrot.lane.b32.xlu0 %v1452, 64
    %v1502 = vpop.permute.xlu0 %1501
    %v1519 = vadd.f32 %v269, %v1472
    %v1520 = vadd.f32 %v272, %v1474
    %v1521 = vadd.f32 %v277, %v1476
    %v1522 = vadd.f32 %v280, %v1478
    %v1523 = vadd.f32 %v285, %v1480
    %v1524 = vadd.f32 %v288, %v1482
    %v1525 = vadd.f32 %v293, %v1484
    %v1526 = vadd.f32 %v296, %v1486
    %v1527 = vadd.f32 %v301, %v1488
    %v1528 = vadd.f32 %v304, %v1490
    %v1529 = vadd.f32 %v309, %v1492
    %v1530 = vadd.f32 %v312, %v1494
    %v1531 = vadd.f32 %v317, %v1496
    %v1532 = vadd.f32 %v320, %v1498
    %v1533 = vadd.f32 %v325, %v1500
    %v1534 = vadd.f32 %v328, %v1502
    %v1535 = vxor.u32 %v1519, 2147483648
    %v1536 = vxor.u32 %v1520, 2147483648
    %v1537 = vxor.u32 %v1521, 2147483648
    %v1538 = vxor.u32 %v1522, 2147483648
    %v1539 = vxor.u32 %v1523, 2147483648
    %v1540 = vxor.u32 %v1524, 2147483648
    %v1541 = vxor.u32 %v1525, 2147483648
    %v1542 = vxor.u32 %v1526, 2147483648
    %v1543 = vxor.u32 %v1527, 2147483648
    %v1544 = vxor.u32 %v1528, 2147483648
    %v1545 = vxor.u32 %v1529, 2147483648
    %v1546 = vxor.u32 %v1530, 2147483648
    %v1547 = vmul.f32 %v1535, 1.442695
    %v1548 = vpow.pop %v1547
    %v1549 = vmul.f32 %v1536, 1.442695
    %v1550 = vpow.pop %v1549
    %v1551 = vmul.f32 %v1537, 1.442695
    %v1552 = vpow.pop %v1551
    %v1553 = vmul.f32 %v1538, 1.442695
    %v1554 = vpow.pop %v1553
    %v1555 = vmul.f32 %v1539, 1.442695
    %v1556 = vpow.pop %v1555
    %v1557 = vmul.f32 %v1540, 1.442695
    %v1558 = vpow.pop %v1557
    %v1559 = vmul.f32 %v1541, 1.442695
    %v1560 = vpow.pop %v1559
    %v1561 = vmul.f32 %v1542, 1.442695
    %v1562 = vpow.pop %v1561
    %v1563 = vmul.f32 %v1543, 1.442695
    %v1564 = vpow.pop %v1563
    %v1565 = vmul.f32 %v1544, 1.442695
    %v1566 = vpow.pop %v1565
    %v1567 = vmul.f32 %v1545, 1.442695
    %v1568 = vpow.pop %v1567
    %v1569 = vmul.f32 %v1546, 1.442695
    %v1570 = vpow.pop %v1569
    %v1571 = vadd.f32 %v1548, 1.0
    %v1572 = vadd.f32 %v1550, 1.0
    %v1573 = vadd.f32 %v1552, 1.0
    %v1574 = vadd.f32 %v1554, 1.0
    %v1575 = vadd.f32 %v1556, 1.0
    %v1576 = vadd.f32 %v1558, 1.0
    %v1577 = vadd.f32 %v1560, 1.0
    %v1578 = vadd.f32 %v1562, 1.0
    %v1579 = vadd.f32 %v1564, 1.0
    %v1580 = vadd.f32 %v1566, 1.0
    %v1581 = vadd.f32 %v1568, 1.0
    %v1582 = vadd.f32 %v1570, 1.0
    %v1583 = vrcp.pop %v1571
    %v1584 = vmul.f32 1.0, %v1583
    %v1585 = vrcp.pop %v1572
    %v1586 = vmul.f32 1.0, %v1585
    %v1587 = vrcp.pop %v1573
    %v1588 = vmul.f32 1.0, %v1587
    %v1589 = vrcp.pop %v1574
    %v1590 = vmul.f32 1.0, %v1589
    %v1591 = vrcp.pop %v1575
    %v1592 = vmul.f32 1.0, %v1591
    %v1593 = vrcp.pop %v1576
    %v1594 = vmul.f32 1.0, %v1593
    %v1595 = vrcp.pop %v1577
    %v1596 = vmul.f32 1.0, %v1595
    %v1597 = vrcp.pop %v1578
    %v1598 = vmul.f32 1.0, %v1597
    %v1599 = vrcp.pop %v1579
    %v1600 = vmul.f32 1.0, %v1599
    %v1601 = vrcp.pop %v1580
    %v1602 = vmul.f32 1.0, %v1601
    %v1603 = vrcp.pop %v1581
    %v1604 = vmul.f32 1.0, %v1603
    %v1605 = vrcp.pop %v1582
    %v1606 = vmul.f32 1.0, %v1605
    %v1607 = vtanh.pop %v1531
    %v1608 = vtanh.pop %v1532
    %v1609 = vtanh.pop %v1533
    %v1610 = vtanh.pop %v1534
    %1615 = vrot.lane.b32.xlu0 %v1336, 16
    %v1616 = vpop.permute.xlu0 %1615
    %1617 = vrot.lane.b32.xlu0 %v1337, 16
    %v1618 = vpop.permute.xlu0 %1617
    %1619 = vrot.lane.b32.xlu0 %v1338, 16
    %v1620 = vpop.permute.xlu0 %1619
    %1621 = vrot.lane.b32.xlu0 %v1339, 16
    %v1622 = vpop.permute.xlu0 %1621
    %v1627 = vmul.f32 %v1592, %v1616
    %v1628 = vmul.f32 %v1594, %v1618
    %v1629 = vmul.f32 %v1596, %v1620
    %v1630 = vmul.f32 %v1598, %v1622
    %v1631 = vmul.f32 %v1584, %v1607
    %v1632 = vmul.f32 %v1586, %v1608
    %v1633 = vmul.f32 %v1588, %v1609
    %v1634 = vmul.f32 %v1590, %v1610
    %v1635 = vadd.f32 %v1627, %v1631
    %v1636 = vadd.f32 %v1628, %v1632
    %v1637 = vadd.f32 %v1629, %v1633
    %v1638 = vadd.f32 %v1630, %v1634
    %v1639 = vtanh.pop %v1635
    %v1640 = vtanh.pop %v1636
    %v1641 = vtanh.pop %v1637
    %v1642 = vtanh.pop %v1638
    %v1643 = vmul.f32 %v1600, %v1639
    %v1644 = vmul.f32 %v1602, %v1640
    %v1645 = vmul.f32 %v1604, %v1641
    %v1646 = vmul.f32 %v1606, %v1642
    %v1647 = vpack.c.bf16 %v1644, %v1643
    %v1648 = vpack.c.bf16 %v1646, %v1645
    %1651 = vrot.lane.b32.xlu0 %v1647, 64
    %v1652 = vpop.permute.xlu0 %1651
    %1653 = vrot.lane.b32.xlu0 %v1648, 64
    %v1654 = vpop.permute.xlu0 %1653
    %1657 = vmatprep.subr.bf16.mxu0 0
    %1658 = vmatpush1.bf16.msra.mxu0 0
    %1659 = vmatprep.subr.bf16.mxu0 0
    %1660 = vmatpush1.bf16.msra.mxu0 0
    %1661 = vmatprep.subr.bf16.mxu0 0
    %1662 = vmatpush1.bf16.msra.mxu0 0
    %1663 = vmatprep.subr.bf16.mxu0 0
    %1664 = vmatpush1.bf16.msra.mxu0 0
    %1665 = vmatprep.subr.bf16.mxu0 0
    %1666 = vmatpush1.bf16.msra.mxu0 0
    %1667 = vmatprep.subr.bf16.mxu0 0
    %1668 = vmatpush1.bf16.msra.mxu0 0
    %1669 = vmatprep.subr.bf16.mxu0 0
    %1670 = vmatpush1.bf16.msra.mxu0 %v1654
    %1671 = vmatprep.subr.bf16.mxu0 0
    %1672 = vmatpush1.bf16.msra.mxu0 %v1652
    %1673 = vmatprep.subr.bf16.mxu0 0
    %1674 = vmatpush2.bf16.msra.mxu0 0
    %1675 = vmatprep.subr.bf16.mxu0 0
    %1676 = vmatpush2.bf16.msra.mxu0 0
    %1677 = vmatprep.subr.bf16.mxu0 0
    %1678 = vmatpush2.bf16.msra.mxu0 0
    %1679 = vmatprep.subr.bf16.mxu0 0
    %1680 = vmatpush2.bf16.msra.mxu0 0
    %1681 = vmatprep.subr.bf16.mxu0 0
    %1682 = vmatpush2.bf16.msra.mxu0 0
    %1683 = vmatprep.subr.bf16.mxu0 0
    %1684 = vmatpush2.bf16.msra.mxu0 0
    %1685 = vmatprep.subr.bf16.mxu0 0
    %1686 = vmatpush2.bf16.msra.mxu0 0
    %1687 = vmatprep.subr.bf16.mxu0 0
    %1688 = vmatpush2.bf16.msra.mxu0 0
    %1689 = vmatprep.mubr.bf16.mxu0 0
    %1690 = vmatmul.mubr.bf16.gmra.mxu0 %v438
    %v1691 = vpop.f32.mrf.mxu0
    %v1692 = vadd.f32 0.0, %v1691
    %v1693 = vpop.f32.mrf.mxu0
    %v1694 = vpop.f32.mrf.mxu0
    %v1695 = vadd.f32 0.0, %v1694
    %v1696 = vpop.f32.mrf.mxu0
    %1697 = vmatprep.mubr.bf16.mxu0 0
    %1698 = vmatmul.mubr.bf16.gmra.mxu0 %v441
    %v1699 = vpop.f32.mrf.mxu0
    %v1700 = vadd.f32 0.0, %v1699
    %v1701 = vpop.f32.mrf.mxu0
    %v1702 = vpop.f32.mrf.mxu0
    %v1703 = vadd.f32 0.0, %v1702
    %v1704 = vpop.f32.mrf.mxu0
    %1705 = vmatprep.mubr.bf16.mxu0 0
    %1706 = vmatmul.mubr.bf16.gmra.mxu0 %v444
    %v1707 = vpop.f32.mrf.mxu0
    %v1708 = vadd.f32 0.0, %v1707
    %v1709 = vpop.f32.mrf.mxu0
    %v1710 = vpop.f32.mrf.mxu0
    %v1711 = vadd.f32 0.0, %v1710
    %v1712 = vpop.f32.mrf.mxu0
    %1713 = vmatprep.mubr.bf16.mxu0 0
    %1714 = vmatmul.mubr.bf16.gmra.mxu0 %v447
    %v1715 = vpop.f32.mrf.mxu0
    %v1716 = vadd.f32 0.0, %v1715
    %v1717 = vpop.f32.mrf.mxu0
    %v1718 = vpop.f32.mrf.mxu0
    %v1719 = vadd.f32 0.0, %v1718
    %v1720 = vpop.f32.mrf.mxu0
    %1721 = vmatprep.mubr.bf16.mxu0 0
    %1722 = vmatmul.mubr.bf16.gmra.mxu0 %v450
    %v1723 = vpop.f32.mrf.mxu0
    %v1724 = vadd.f32 0.0, %v1723
    %v1725 = vpop.f32.mrf.mxu0
    %v1726 = vpop.f32.mrf.mxu0
    %v1727 = vadd.f32 0.0, %v1726
    %v1728 = vpop.f32.mrf.mxu0
    %1729 = vmatprep.mubr.bf16.mxu0 0
    %1730 = vmatmul.mubr.bf16.gmra.mxu0 %v453
    %v1731 = vpop.f32.mrf.mxu0
    %v1732 = vadd.f32 0.0, %v1731
    %v1733 = vpop.f32.mrf.mxu0
    %v1734 = vpop.f32.mrf.mxu0
    %v1735 = vadd.f32 0.0, %v1734
    %v1736 = vpop.f32.mrf.mxu0
    %1737 = vmatprep.mubr.bf16.mxu0 0
    %1738 = vmatmul.mubr.bf16.gmra.mxu0 %v456
    %v1739 = vpop.f32.mrf.mxu0
    %v1740 = vadd.f32 0.0, %v1739
    %v1741 = vpop.f32.mrf.mxu0
    %v1742 = vpop.f32.mrf.mxu0
    %v1743 = vadd.f32 0.0, %v1742
    %v1744 = vpop.f32.mrf.mxu0
    %1745 = vmatprep.mubr.bf16.mxu0 0
    %1746 = vmatmul.mubr.bf16.gmra.mxu0 %v459
    %v1747 = vpop.f32.mrf.mxu0
    %v1748 = vadd.f32 0.0, %v1747
    %v1749 = vpop.f32.mrf.mxu0
    %v1750 = vpop.f32.mrf.mxu0
    %v1751 = vadd.f32 0.0, %v1750
    %v1752 = vpop.f32.mrf.mxu0
    %1753 = vdwg.mxu0
    %1770 = vrot.lane.b32.xlu0 %v1692, 80
    %v1771 = vpop.permute.xlu0 %1770
    %1772 = vrot.lane.b32.xlu0 %v1695, 80
    %v1773 = vpop.permute.xlu0 %1772
    %1774 = vrot.lane.b32.xlu0 %v1700, 80
    %v1775 = vpop.permute.xlu0 %1774
    %1776 = vrot.lane.b32.xlu0 %v1703, 80
    %v1777 = vpop.permute.xlu0 %1776
    %1778 = vrot.lane.b32.xlu0 %v1708, 80
    %v1779 = vpop.permute.xlu0 %1778
    %1780 = vrot.lane.b32.xlu0 %v1711, 80
    %v1781 = vpop.permute.xlu0 %1780
    %1782 = vrot.lane.b32.xlu0 %v1716, 80
    %v1783 = vpop.permute.xlu0 %1782
    %1784 = vrot.lane.b32.xlu0 %v1719, 80
    %v1785 = vpop.permute.xlu0 %1784
    %1786 = vrot.lane.b32.xlu0 %v1724, 80
    %v1787 = vpop.permute.xlu0 %1786
    %1788 = vrot.lane.b32.xlu0 %v1727, 80
    %v1789 = vpop.permute.xlu0 %1788
    %1790 = vrot.lane.b32.xlu0 %v1732, 80
    %v1791 = vpop.permute.xlu0 %1790
    %1792 = vrot.lane.b32.xlu0 %v1735, 80
    %v1793 = vpop.permute.xlu0 %1792
    %1794 = vrot.lane.b32.xlu0 %v1740, 80
    %v1795 = vpop.permute.xlu0 %1794
    %1796 = vrot.lane.b32.xlu0 %v1743, 80
    %v1797 = vpop.permute.xlu0 %1796
    %1798 = vrot.lane.b32.xlu0 %v1748, 80
    %v1799 = vpop.permute.xlu0 %1798
    %1800 = vrot.lane.b32.xlu0 %v1751, 80
    %v1801 = vpop.permute.xlu0 %1800
    %v1818 = vadd.f32 %v269, %v1771
    %v1819 = vadd.f32 %v272, %v1773
    %v1820 = vadd.f32 %v277, %v1775
    %v1821 = vadd.f32 %v280, %v1777
    %v1822 = vadd.f32 %v285, %v1779
    %v1823 = vadd.f32 %v288, %v1781
    %v1824 = vadd.f32 %v293, %v1783
    %v1825 = vadd.f32 %v296, %v1785
    %v1826 = vadd.f32 %v301, %v1787
    %v1827 = vadd.f32 %v304, %v1789
    %v1828 = vadd.f32 %v309, %v1791
    %v1829 = vadd.f32 %v312, %v1793
    %v1830 = vadd.f32 %v317, %v1795
    %v1831 = vadd.f32 %v320, %v1797
    %v1832 = vadd.f32 %v325, %v1799
    %v1833 = vadd.f32 %v328, %v1801
    %v1834 = vxor.u32 %v1818, 2147483648
    %v1835 = vxor.u32 %v1819, 2147483648
    %v1836 = vxor.u32 %v1820, 2147483648
    %v1837 = vxor.u32 %v1821, 2147483648
    %v1838 = vxor.u32 %v1822, 2147483648
    %v1839 = vxor.u32 %v1823, 2147483648
    %v1840 = vxor.u32 %v1824, 2147483648
    %v1841 = vxor.u32 %v1825, 2147483648
    %v1842 = vxor.u32 %v1826, 2147483648
    %v1843 = vxor.u32 %v1827, 2147483648
    %v1844 = vxor.u32 %v1828, 2147483648
    %v1845 = vxor.u32 %v1829, 2147483648
    %v1846 = vmul.f32 %v1834, 1.442695
    %v1847 = vpow.pop %v1846
    %v1848 = vmul.f32 %v1835, 1.442695
    %v1849 = vpow.pop %v1848
    %v1850 = vmul.f32 %v1836, 1.442695
    %v1851 = vpow.pop %v1850
    %v1852 = vmul.f32 %v1837, 1.442695
    %v1853 = vpow.pop %v1852
    %v1854 = vmul.f32 %v1838, 1.442695
    %v1855 = vpow.pop %v1854
    %v1856 = vmul.f32 %v1839, 1.442695
    %v1857 = vpow.pop %v1856
    %v1858 = vmul.f32 %v1840, 1.442695
    %v1859 = vpow.pop %v1858
    %v1860 = vmul.f32 %v1841, 1.442695
    %v1861 = vpow.pop %v1860
    %v1862 = vmul.f32 %v1842, 1.442695
    %v1863 = vpow.pop %v1862
    %v1864 = vmul.f32 %v1843, 1.442695
    %v1865 = vpow.pop %v1864
    %v1866 = vmul.f32 %v1844, 1.442695
    %v1867 = vpow.pop %v1866
    %v1868 = vmul.f32 %v1845, 1.442695
    %v1869 = vpow.pop %v1868
    %v1870 = vadd.f32 %v1847, 1.0
    %v1871 = vadd.f32 %v1849, 1.0
    %v1872 = vadd.f32 %v1851, 1.0
    %v1873 = vadd.f32 %v1853, 1.0
    %v1874 = vadd.f32 %v1855, 1.0
    %v1875 = vadd.f32 %v1857, 1.0
    %v1876 = vadd.f32 %v1859, 1.0
    %v1877 = vadd.f32 %v1861, 1.0
    %v1878 = vadd.f32 %v1863, 1.0
    %v1879 = vadd.f32 %v1865, 1.0
    %v1880 = vadd.f32 %v1867, 1.0
    %v1881 = vadd.f32 %v1869, 1.0
    %v1882 = vrcp.pop %v1870
    %v1883 = vmul.f32 1.0, %v1882
    %v1884 = vrcp.pop %v1871
    %v1885 = vmul.f32 1.0, %v1884
    %v1886 = vrcp.pop %v1872
    %v1887 = vmul.f32 1.0, %v1886
    %v1888 = vrcp.pop %v1873
    %v1889 = vmul.f32 1.0, %v1888
    %v1890 = vrcp.pop %v1874
    %v1891 = vmul.f32 1.0, %v1890
    %v1892 = vrcp.pop %v1875
    %v1893 = vmul.f32 1.0, %v1892
    %v1894 = vrcp.pop %v1876
    %v1895 = vmul.f32 1.0, %v1894
    %v1896 = vrcp.pop %v1877
    %v1897 = vmul.f32 1.0, %v1896
    %v1898 = vrcp.pop %v1878
    %v1899 = vmul.f32 1.0, %v1898
    %v1900 = vrcp.pop %v1879
    %v1901 = vmul.f32 1.0, %v1900
    %v1902 = vrcp.pop %v1880
    %v1903 = vmul.f32 1.0, %v1902
    %v1904 = vrcp.pop %v1881
    %v1905 = vmul.f32 1.0, %v1904
    %v1906 = vtanh.pop %v1830
    %v1907 = vtanh.pop %v1831
    %v1908 = vtanh.pop %v1832
    %v1909 = vtanh.pop %v1833
    %1914 = vrot.lane.b32.xlu0 %v1635, 16
    %v1915 = vpop.permute.xlu0 %1914
    %1916 = vrot.lane.b32.xlu0 %v1636, 16
    %v1917 = vpop.permute.xlu0 %1916
    %1918 = vrot.lane.b32.xlu0 %v1637, 16
    %v1919 = vpop.permute.xlu0 %1918
    %1920 = vrot.lane.b32.xlu0 %v1638, 16
    %v1921 = vpop.permute.xlu0 %1920
    %v1926 = vmul.f32 %v1891, %v1915
    %v1927 = vmul.f32 %v1893, %v1917
    %v1928 = vmul.f32 %v1895, %v1919
    %v1929 = vmul.f32 %v1897, %v1921
    %v1930 = vmul.f32 %v1883, %v1906
    %v1931 = vmul.f32 %v1885, %v1907
    %v1932 = vmul.f32 %v1887, %v1908
    %v1933 = vmul.f32 %v1889, %v1909
    %v1934 = vadd.f32 %v1926, %v1930
    %v1935 = vadd.f32 %v1927, %v1931
    %v1936 = vadd.f32 %v1928, %v1932
    %v1937 = vadd.f32 %v1929, %v1933
    %v1938 = vtanh.pop %v1934
    %v1939 = vtanh.pop %v1935
    %v1940 = vtanh.pop %v1936
    %v1941 = vtanh.pop %v1937
    %v1942 = vmul.f32 %v1899, %v1938
    %v1943 = vmul.f32 %v1901, %v1939
    %v1944 = vmul.f32 %v1903, %v1940
    %v1945 = vmul.f32 %v1905, %v1941
    %v1946 = vpack.c.bf16 %v1943, %v1942
    %v1947 = vpack.c.bf16 %v1945, %v1944
    %1950 = vrot.lane.b32.xlu0 %v1946, 48
    %v1951 = vpop.permute.xlu0 %1950
    %1952 = vrot.lane.b32.xlu0 %v1947, 48
    %v1953 = vpop.permute.xlu0 %1952
    %1956 = vmatprep.subr.bf16.mxu0 0
    %1957 = vmatpush1.bf16.msra.mxu0 0
    %1958 = vmatprep.subr.bf16.mxu0 0
    %1959 = vmatpush1.bf16.msra.mxu0 0
    %1960 = vmatprep.subr.bf16.mxu0 0
    %1961 = vmatpush1.bf16.msra.mxu0 0
    %1962 = vmatprep.subr.bf16.mxu0 0
    %1963 = vmatpush1.bf16.msra.mxu0 0
    %1964 = vmatprep.subr.bf16.mxu0 0
    %1965 = vmatpush1.bf16.msra.mxu0 0
    %1966 = vmatprep.subr.bf16.mxu0 0
    %1967 = vmatpush1.bf16.msra.mxu0 0
    %1968 = vmatprep.subr.bf16.mxu0 0
    %1969 = vmatpush1.bf16.msra.mxu0 %v1953
    %1970 = vmatprep.subr.bf16.mxu0 0
    %1971 = vmatpush1.bf16.msra.mxu0 %v1951
    %1972 = vmatprep.subr.bf16.mxu0 0
    %1973 = vmatpush2.bf16.msra.mxu0 0
    %1974 = vmatprep.subr.bf16.mxu0 0
    %1975 = vmatpush2.bf16.msra.mxu0 0
    %1976 = vmatprep.subr.bf16.mxu0 0
    %1977 = vmatpush2.bf16.msra.mxu0 0
    %1978 = vmatprep.subr.bf16.mxu0 0
    %1979 = vmatpush2.bf16.msra.mxu0 0
    %1980 = vmatprep.subr.bf16.mxu0 0
    %1981 = vmatpush2.bf16.msra.mxu0 0
    %1982 = vmatprep.subr.bf16.mxu0 0
    %1983 = vmatpush2.bf16.msra.mxu0 0
    %1984 = vmatprep.subr.bf16.mxu0 0
    %1985 = vmatpush2.bf16.msra.mxu0 0
    %1986 = vmatprep.subr.bf16.mxu0 0
    %1987 = vmatpush2.bf16.msra.mxu0 0
    %1988 = vmatprep.mubr.bf16.mxu0 0
    %1989 = vmatmul.mubr.bf16.gmra.mxu0 %v438
    %v1990 = vpop.f32.mrf.mxu0
    %v1991 = vadd.f32 0.0, %v1990
    %v1992 = vpop.f32.mrf.mxu0
    %v1993 = vpop.f32.mrf.mxu0
    %v1994 = vadd.f32 0.0, %v1993
    %v1995 = vpop.f32.mrf.mxu0
    %1996 = vmatprep.mubr.bf16.mxu0 0
    %1997 = vmatmul.mubr.bf16.gmra.mxu0 %v441
    %v1998 = vpop.f32.mrf.mxu0
    %v1999 = vadd.f32 0.0, %v1998
    %v2000 = vpop.f32.mrf.mxu0
    %v2001 = vpop.f32.mrf.mxu0
    %v2002 = vadd.f32 0.0, %v2001
    %v2003 = vpop.f32.mrf.mxu0
    %2004 = vmatprep.mubr.bf16.mxu0 0
    %2005 = vmatmul.mubr.bf16.gmra.mxu0 %v444
    %v2006 = vpop.f32.mrf.mxu0
    %v2007 = vadd.f32 0.0, %v2006
    %v2008 = vpop.f32.mrf.mxu0
    %v2009 = vpop.f32.mrf.mxu0
    %v2010 = vadd.f32 0.0, %v2009
    %v2011 = vpop.f32.mrf.mxu0
    %2012 = vmatprep.mubr.bf16.mxu0 0
    %2013 = vmatmul.mubr.bf16.gmra.mxu0 %v447
    %v2014 = vpop.f32.mrf.mxu0
    %v2015 = vadd.f32 0.0, %v2014
    %v2016 = vpop.f32.mrf.mxu0
    %v2017 = vpop.f32.mrf.mxu0
    %v2018 = vadd.f32 0.0, %v2017
    %v2019 = vpop.f32.mrf.mxu0
    %2020 = vmatprep.mubr.bf16.mxu0 0
    %2021 = vmatmul.mubr.bf16.gmra.mxu0 %v450
    %v2022 = vpop.f32.mrf.mxu0
    %v2023 = vadd.f32 0.0, %v2022
    %v2024 = vpop.f32.mrf.mxu0
    %v2025 = vpop.f32.mrf.mxu0
    %v2026 = vadd.f32 0.0, %v2025
    %v2027 = vpop.f32.mrf.mxu0
    %2028 = vmatprep.mubr.bf16.mxu0 0
    %2029 = vmatmul.mubr.bf16.gmra.mxu0 %v453
    %v2030 = vpop.f32.mrf.mxu0
    %v2031 = vadd.f32 0.0, %v2030
    %v2032 = vpop.f32.mrf.mxu0
    %v2033 = vpop.f32.mrf.mxu0
    %v2034 = vadd.f32 0.0, %v2033
    %v2035 = vpop.f32.mrf.mxu0
    %2036 = vmatprep.mubr.bf16.mxu0 0
    %2037 = vmatmul.mubr.bf16.gmra.mxu0 %v456
    %v2038 = vpop.f32.mrf.mxu0
    %v2039 = vadd.f32 0.0, %v2038
    %v2040 = vpop.f32.mrf.mxu0
    %v2041 = vpop.f32.mrf.mxu0
    %v2042 = vadd.f32 0.0, %v2041
    %v2043 = vpop.f32.mrf.mxu0
    %2044 = vmatprep.mubr.bf16.mxu0 0
    %2045 = vmatmul.mubr.bf16.gmra.mxu0 %v459
    %v2046 = vpop.f32.mrf.mxu0
    %v2047 = vadd.f32 0.0, %v2046
    %v2048 = vpop.f32.mrf.mxu0
    %v2049 = vpop.f32.mrf.mxu0
    %v2050 = vadd.f32 0.0, %v2049
    %v2051 = vpop.f32.mrf.mxu0
    %2052 = vdwg.mxu0
    %2069 = vrot.lane.b32.xlu0 %v1991, 96
    %v2070 = vpop.permute.xlu0 %2069
    %2071 = vrot.lane.b32.xlu0 %v1994, 96
    %v2072 = vpop.permute.xlu0 %2071
    %2073 = vrot.lane.b32.xlu0 %v1999, 96
    %v2074 = vpop.permute.xlu0 %2073
    %2075 = vrot.lane.b32.xlu0 %v2002, 96
    %v2076 = vpop.permute.xlu0 %2075
    %2077 = vrot.lane.b32.xlu0 %v2007, 96
    %v2078 = vpop.permute.xlu0 %2077
    %2079 = vrot.lane.b32.xlu0 %v2010, 96
    %v2080 = vpop.permute.xlu0 %2079
    %2081 = vrot.lane.b32.xlu0 %v2015, 96
    %v2082 = vpop.permute.xlu0 %2081
    %2083 = vrot.lane.b32.xlu0 %v2018, 96
    %v2084 = vpop.permute.xlu0 %2083
    %2085 = vrot.lane.b32.xlu0 %v2023, 96
    %v2086 = vpop.permute.xlu0 %2085
    %2087 = vrot.lane.b32.xlu0 %v2026, 96
    %v2088 = vpop.permute.xlu0 %2087
    %2089 = vrot.lane.b32.xlu0 %v2031, 96
    %v2090 = vpop.permute.xlu0 %2089
    %2091 = vrot.lane.b32.xlu0 %v2034, 96
    %v2092 = vpop.permute.xlu0 %2091
    %2093 = vrot.lane.b32.xlu0 %v2039, 96
    %v2094 = vpop.permute.xlu0 %2093
    %2095 = vrot.lane.b32.xlu0 %v2042, 96
    %v2096 = vpop.permute.xlu0 %2095
    %2097 = vrot.lane.b32.xlu0 %v2047, 96
    %v2098 = vpop.permute.xlu0 %2097
    %2099 = vrot.lane.b32.xlu0 %v2050, 96
    %v2100 = vpop.permute.xlu0 %2099
    %v2117 = vadd.f32 %v269, %v2070
    %v2118 = vadd.f32 %v272, %v2072
    %v2119 = vadd.f32 %v277, %v2074
    %v2120 = vadd.f32 %v280, %v2076
    %v2121 = vadd.f32 %v285, %v2078
    %v2122 = vadd.f32 %v288, %v2080
    %v2123 = vadd.f32 %v293, %v2082
    %v2124 = vadd.f32 %v296, %v2084
    %v2125 = vadd.f32 %v301, %v2086
    %v2126 = vadd.f32 %v304, %v2088
    %v2127 = vadd.f32 %v309, %v2090
    %v2128 = vadd.f32 %v312, %v2092
    %v2129 = vadd.f32 %v317, %v2094
    %v2130 = vadd.f32 %v320, %v2096
    %v2131 = vadd.f32 %v325, %v2098
    %v2132 = vadd.f32 %v328, %v2100
    %v2133 = vxor.u32 %v2117, 2147483648
    %v2134 = vxor.u32 %v2118, 2147483648
    %v2135 = vxor.u32 %v2119, 2147483648
    %v2136 = vxor.u32 %v2120, 2147483648
    %v2137 = vxor.u32 %v2121, 2147483648
    %v2138 = vxor.u32 %v2122, 2147483648
    %v2139 = vxor.u32 %v2123, 2147483648
    %v2140 = vxor.u32 %v2124, 2147483648
    %v2141 = vxor.u32 %v2125, 2147483648
    %v2142 = vxor.u32 %v2126, 2147483648
    %v2143 = vxor.u32 %v2127, 2147483648
    %v2144 = vxor.u32 %v2128, 2147483648
    %v2145 = vmul.f32 %v2133, 1.442695
    %v2146 = vpow.pop %v2145
    %v2147 = vmul.f32 %v2134, 1.442695
    %v2148 = vpow.pop %v2147
    %v2149 = vmul.f32 %v2135, 1.442695
    %v2150 = vpow.pop %v2149
    %v2151 = vmul.f32 %v2136, 1.442695
    %v2152 = vpow.pop %v2151
    %v2153 = vmul.f32 %v2137, 1.442695
    %v2154 = vpow.pop %v2153
    %v2155 = vmul.f32 %v2138, 1.442695
    %v2156 = vpow.pop %v2155
    %v2157 = vmul.f32 %v2139, 1.442695
    %v2158 = vpow.pop %v2157
    %v2159 = vmul.f32 %v2140, 1.442695
    %v2160 = vpow.pop %v2159
    %v2161 = vmul.f32 %v2141, 1.442695
    %v2162 = vpow.pop %v2161
    %v2163 = vmul.f32 %v2142, 1.442695
    %v2164 = vpow.pop %v2163
    %v2165 = vmul.f32 %v2143, 1.442695
    %v2166 = vpow.pop %v2165
    %v2167 = vmul.f32 %v2144, 1.442695
    %v2168 = vpow.pop %v2167
    %v2169 = vadd.f32 %v2146, 1.0
    %v2170 = vadd.f32 %v2148, 1.0
    %v2171 = vadd.f32 %v2150, 1.0
    %v2172 = vadd.f32 %v2152, 1.0
    %v2173 = vadd.f32 %v2154, 1.0
    %v2174 = vadd.f32 %v2156, 1.0
    %v2175 = vadd.f32 %v2158, 1.0
    %v2176 = vadd.f32 %v2160, 1.0
    %v2177 = vadd.f32 %v2162, 1.0
    %v2178 = vadd.f32 %v2164, 1.0
    %v2179 = vadd.f32 %v2166, 1.0
    %v2180 = vadd.f32 %v2168, 1.0
    %v2181 = vrcp.pop %v2169
    %v2182 = vmul.f32 1.0, %v2181
    %v2183 = vrcp.pop %v2170
    %v2184 = vmul.f32 1.0, %v2183
    %v2185 = vrcp.pop %v2171
    %v2186 = vmul.f32 1.0, %v2185
    %v2187 = vrcp.pop %v2172
    %v2188 = vmul.f32 1.0, %v2187
    %v2189 = vrcp.pop %v2173
    %v2190 = vmul.f32 1.0, %v2189
    %v2191 = vrcp.pop %v2174
    %v2192 = vmul.f32 1.0, %v2191
    %v2193 = vrcp.pop %v2175
    %v2194 = vmul.f32 1.0, %v2193
    %v2195 = vrcp.pop %v2176
    %v2196 = vmul.f32 1.0, %v2195
    %v2197 = vrcp.pop %v2177
    %v2198 = vmul.f32 1.0, %v2197
    %v2199 = vrcp.pop %v2178
    %v2200 = vmul.f32 1.0, %v2199
    %v2201 = vrcp.pop %v2179
    %v2202 = vmul.f32 1.0, %v2201
    %v2203 = vrcp.pop %v2180
    %v2204 = vmul.f32 1.0, %v2203
    %v2205 = vtanh.pop %v2129
    %v2206 = vtanh.pop %v2130
    %v2207 = vtanh.pop %v2131
    %v2208 = vtanh.pop %v2132
    %2213 = vrot.lane.b32.xlu0 %v1934, 16
    %v2214 = vpop.permute.xlu0 %2213
    %2215 = vrot.lane.b32.xlu0 %v1935, 16
    %v2216 = vpop.permute.xlu0 %2215
    %2217 = vrot.lane.b32.xlu0 %v1936, 16
    %v2218 = vpop.permute.xlu0 %2217
    %2219 = vrot.lane.b32.xlu0 %v1937, 16
    %v2220 = vpop.permute.xlu0 %2219
    %v2225 = vmul.f32 %v2190, %v2214
    %v2226 = vmul.f32 %v2192, %v2216
    %v2227 = vmul.f32 %v2194, %v2218
    %v2228 = vmul.f32 %v2196, %v2220
    %v2229 = vmul.f32 %v2182, %v2205
    %v2230 = vmul.f32 %v2184, %v2206
    %v2231 = vmul.f32 %v2186, %v2207
    %v2232 = vmul.f32 %v2188, %v2208
    %v2233 = vadd.f32 %v2225, %v2229
    %v2234 = vadd.f32 %v2226, %v2230
    %v2235 = vadd.f32 %v2227, %v2231
    %v2236 = vadd.f32 %v2228, %v2232
    %v2237 = vtanh.pop %v2233
    %v2238 = vtanh.pop %v2234
    %v2239 = vtanh.pop %v2235
    %v2240 = vtanh.pop %v2236
    %v2241 = vmul.f32 %v2198, %v2237
    %v2242 = vmul.f32 %v2200, %v2238
    %v2243 = vmul.f32 %v2202, %v2239
    %v2244 = vmul.f32 %v2204, %v2240
    %v2245 = vpack.c.bf16 %v2242, %v2241
    %v2246 = vpack.c.bf16 %v2244, %v2243
    %2249 = vrot.lane.b32.xlu0 %v2245, 32
    %v2250 = vpop.permute.xlu0 %2249
    %2251 = vrot.lane.b32.xlu0 %v2246, 32
    %v2252 = vpop.permute.xlu0 %2251
    %2255 = vmatprep.subr.bf16.mxu0 0
    %2256 = vmatpush1.bf16.msra.mxu0 0
    %2257 = vmatprep.subr.bf16.mxu0 0
    %2258 = vmatpush1.bf16.msra.mxu0 0
    %2259 = vmatprep.subr.bf16.mxu0 0
    %2260 = vmatpush1.bf16.msra.mxu0 0
    %2261 = vmatprep.subr.bf16.mxu0 0
    %2262 = vmatpush1.bf16.msra.mxu0 0
    %2263 = vmatprep.subr.bf16.mxu0 0
    %2264 = vmatpush1.bf16.msra.mxu0 0
    %2265 = vmatprep.subr.bf16.mxu0 0
    %2266 = vmatpush1.bf16.msra.mxu0 0
    %2267 = vmatprep.subr.bf16.mxu0 0
    %2268 = vmatpush1.bf16.msra.mxu0 %v2252
    %2269 = vmatprep.subr.bf16.mxu0 0
    %2270 = vmatpush1.bf16.msra.mxu0 %v2250
    %2271 = vmatprep.subr.bf16.mxu0 0
    %2272 = vmatpush2.bf16.msra.mxu0 0
    %2273 = vmatprep.subr.bf16.mxu0 0
    %2274 = vmatpush2.bf16.msra.mxu0 0
    %2275 = vmatprep.subr.bf16.mxu0 0
    %2276 = vmatpush2.bf16.msra.mxu0 0
    %2277 = vmatprep.subr.bf16.mxu0 0
    %2278 = vmatpush2.bf16.msra.mxu0 0
    %2279 = vmatprep.subr.bf16.mxu0 0
    %2280 = vmatpush2.bf16.msra.mxu0 0
    %2281 = vmatprep.subr.bf16.mxu0 0
    %2282 = vmatpush2.bf16.msra.mxu0 0
    %2283 = vmatprep.subr.bf16.mxu0 0
    %2284 = vmatpush2.bf16.msra.mxu0 0
    %2285 = vmatprep.subr.bf16.mxu0 0
    %2286 = vmatpush2.bf16.msra.mxu0 0
    %2287 = vmatprep.mubr.bf16.mxu0 0
    %2288 = vmatmul.mubr.bf16.gmra.mxu0 %v438
    %v2289 = vpop.f32.mrf.mxu0
    %v2290 = vadd.f32 0.0, %v2289
    %v2291 = vpop.f32.mrf.mxu0
    %v2292 = vpop.f32.mrf.mxu0
    %v2293 = vadd.f32 0.0, %v2292
    %v2294 = vpop.f32.mrf.mxu0
    %2295 = vmatprep.mubr.bf16.mxu0 0
    %2296 = vmatmul.mubr.bf16.gmra.mxu0 %v441
    %v2297 = vpop.f32.mrf.mxu0
    %v2298 = vadd.f32 0.0, %v2297
    %v2299 = vpop.f32.mrf.mxu0
    %v2300 = vpop.f32.mrf.mxu0
    %v2301 = vadd.f32 0.0, %v2300
    %v2302 = vpop.f32.mrf.mxu0
    %2303 = vmatprep.mubr.bf16.mxu0 0
    %2304 = vmatmul.mubr.bf16.gmra.mxu0 %v444
    %v2305 = vpop.f32.mrf.mxu0
    %v2306 = vadd.f32 0.0, %v2305
    %v2307 = vpop.f32.mrf.mxu0
    %v2308 = vpop.f32.mrf.mxu0
    %v2309 = vadd.f32 0.0, %v2308
    %v2310 = vpop.f32.mrf.mxu0
    %2311 = vmatprep.mubr.bf16.mxu0 0
    %2312 = vmatmul.mubr.bf16.gmra.mxu0 %v447
    %v2313 = vpop.f32.mrf.mxu0
    %v2314 = vadd.f32 0.0, %v2313
    %v2315 = vpop.f32.mrf.mxu0
    %v2316 = vpop.f32.mrf.mxu0
    %v2317 = vadd.f32 0.0, %v2316
    %v2318 = vpop.f32.mrf.mxu0
    %2319 = vmatprep.mubr.bf16.mxu0 0
    %2320 = vmatmul.mubr.bf16.gmra.mxu0 %v450
    %v2321 = vpop.f32.mrf.mxu0
    %v2322 = vadd.f32 0.0, %v2321
    %v2323 = vpop.f32.mrf.mxu0
    %v2324 = vpop.f32.mrf.mxu0
    %v2325 = vadd.f32 0.0, %v2324
    %v2326 = vpop.f32.mrf.mxu0
    %2327 = vmatprep.mubr.bf16.mxu0 0
    %2328 = vmatmul.mubr.bf16.gmra.mxu0 %v453
    %v2329 = vpop.f32.mrf.mxu0
    %v2330 = vadd.f32 0.0, %v2329
    %v2331 = vpop.f32.mrf.mxu0
    %v2332 = vpop.f32.mrf.mxu0
    %v2333 = vadd.f32 0.0, %v2332
    %v2334 = vpop.f32.mrf.mxu0
    %2335 = vmatprep.mubr.bf16.mxu0 0
    %2336 = vmatmul.mubr.bf16.gmra.mxu0 %v456
    %v2337 = vpop.f32.mrf.mxu0
    %v2338 = vadd.f32 0.0, %v2337
    %v2339 = vpop.f32.mrf.mxu0
    %v2340 = vpop.f32.mrf.mxu0
    %v2341 = vadd.f32 0.0, %v2340
    %v2342 = vpop.f32.mrf.mxu0
    %2343 = vmatprep.mubr.bf16.mxu0 0
    %2344 = vmatmul.mubr.bf16.gmra.mxu0 %v459
    %v2345 = vpop.f32.mrf.mxu0
    %v2346 = vadd.f32 0.0, %v2345
    %v2347 = vpop.f32.mrf.mxu0
    %v2348 = vpop.f32.mrf.mxu0
    %v2349 = vadd.f32 0.0, %v2348
    %v2350 = vpop.f32.mrf.mxu0
    %2351 = vdwg.mxu0
    %2368 = vrot.lane.b32.xlu0 %v2290, 112
    %v2369 = vpop.permute.xlu0 %2368
    %2370 = vrot.lane.b32.xlu0 %v2293, 112
    %v2371 = vpop.permute.xlu0 %2370
    %2372 = vrot.lane.b32.xlu0 %v2298, 112
    %v2373 = vpop.permute.xlu0 %2372
    %2374 = vrot.lane.b32.xlu0 %v2301, 112
    %v2375 = vpop.permute.xlu0 %2374
    %2376 = vrot.lane.b32.xlu0 %v2306, 112
    %v2377 = vpop.permute.xlu0 %2376
    %2378 = vrot.lane.b32.xlu0 %v2309, 112
    %v2379 = vpop.permute.xlu0 %2378
    %2380 = vrot.lane.b32.xlu0 %v2314, 112
    %v2381 = vpop.permute.xlu0 %2380
    %2382 = vrot.lane.b32.xlu0 %v2317, 112
    %v2383 = vpop.permute.xlu0 %2382
    %2384 = vrot.lane.b32.xlu0 %v2322, 112
    %v2385 = vpop.permute.xlu0 %2384
    %2386 = vrot.lane.b32.xlu0 %v2325, 112
    %v2387 = vpop.permute.xlu0 %2386
    %2388 = vrot.lane.b32.xlu0 %v2330, 112
    %v2389 = vpop.permute.xlu0 %2388
    %2390 = vrot.lane.b32.xlu0 %v2333, 112
    %v2391 = vpop.permute.xlu0 %2390
    %2392 = vrot.lane.b32.xlu0 %v2338, 112
    %v2393 = vpop.permute.xlu0 %2392
    %2394 = vrot.lane.b32.xlu0 %v2341, 112
    %v2395 = vpop.permute.xlu0 %2394
    %2396 = vrot.lane.b32.xlu0 %v2346, 112
    %v2397 = vpop.permute.xlu0 %2396
    %2398 = vrot.lane.b32.xlu0 %v2349, 112
    %v2399 = vpop.permute.xlu0 %2398
    %v2416 = vadd.f32 %v269, %v2369
    %v2417 = vadd.f32 %v272, %v2371
    %v2418 = vadd.f32 %v277, %v2373
    %v2419 = vadd.f32 %v280, %v2375
    %v2420 = vadd.f32 %v285, %v2377
    %v2421 = vadd.f32 %v288, %v2379
    %v2422 = vadd.f32 %v293, %v2381
    %v2423 = vadd.f32 %v296, %v2383
    %v2424 = vadd.f32 %v301, %v2385
    %v2425 = vadd.f32 %v304, %v2387
    %v2426 = vadd.f32 %v309, %v2389
    %v2427 = vadd.f32 %v312, %v2391
    %v2428 = vadd.f32 %v317, %v2393
    %v2429 = vadd.f32 %v320, %v2395
    %v2430 = vadd.f32 %v325, %v2397
    %v2431 = vadd.f32 %v328, %v2399
    %v2432 = vxor.u32 %v2416, 2147483648
    %v2433 = vxor.u32 %v2417, 2147483648
    %v2434 = vxor.u32 %v2418, 2147483648
    %v2435 = vxor.u32 %v2419, 2147483648
    %v2436 = vxor.u32 %v2420, 2147483648
    %v2437 = vxor.u32 %v2421, 2147483648
    %v2438 = vxor.u32 %v2422, 2147483648
    %v2439 = vxor.u32 %v2423, 2147483648
    %v2440 = vxor.u32 %v2424, 2147483648
    %v2441 = vxor.u32 %v2425, 2147483648
    %v2442 = vxor.u32 %v2426, 2147483648
    %v2443 = vxor.u32 %v2427, 2147483648
    %v2444 = vmul.f32 %v2432, 1.442695
    %v2445 = vpow.pop %v2444
    %v2446 = vmul.f32 %v2433, 1.442695
    %v2447 = vpow.pop %v2446
    %v2448 = vmul.f32 %v2434, 1.442695
    %v2449 = vpow.pop %v2448
    %v2450 = vmul.f32 %v2435, 1.442695
    %v2451 = vpow.pop %v2450
    %v2452 = vmul.f32 %v2436, 1.442695
    %v2453 = vpow.pop %v2452
    %v2454 = vmul.f32 %v2437, 1.442695
    %v2455 = vpow.pop %v2454
    %v2456 = vmul.f32 %v2438, 1.442695
    %v2457 = vpow.pop %v2456
    %v2458 = vmul.f32 %v2439, 1.442695
    %v2459 = vpow.pop %v2458
    %v2460 = vmul.f32 %v2440, 1.442695
    %v2461 = vpow.pop %v2460
    %v2462 = vmul.f32 %v2441, 1.442695
    %v2463 = vpow.pop %v2462
    %v2464 = vmul.f32 %v2442, 1.442695
    %v2465 = vpow.pop %v2464
    %v2466 = vmul.f32 %v2443, 1.442695
    %v2467 = vpow.pop %v2466
    %v2468 = vadd.f32 %v2445, 1.0
    %v2469 = vadd.f32 %v2447, 1.0
    %v2470 = vadd.f32 %v2449, 1.0
    %v2471 = vadd.f32 %v2451, 1.0
    %v2472 = vadd.f32 %v2453, 1.0
    %v2473 = vadd.f32 %v2455, 1.0
    %v2474 = vadd.f32 %v2457, 1.0
    %v2475 = vadd.f32 %v2459, 1.0
    %v2476 = vadd.f32 %v2461, 1.0
    %v2477 = vadd.f32 %v2463, 1.0
    %v2478 = vadd.f32 %v2465, 1.0
    %v2479 = vadd.f32 %v2467, 1.0
    %v2480 = vrcp.pop %v2468
    %v2481 = vmul.f32 1.0, %v2480
    %v2482 = vrcp.pop %v2469
    %v2483 = vmul.f32 1.0, %v2482
    %v2484 = vrcp.pop %v2470
    %v2485 = vmul.f32 1.0, %v2484
    %v2486 = vrcp.pop %v2471
    %v2487 = vmul.f32 1.0, %v2486
    %v2488 = vrcp.pop %v2472
    %v2489 = vmul.f32 1.0, %v2488
    %v2490 = vrcp.pop %v2473
    %v2491 = vmul.f32 1.0, %v2490
    %v2492 = vrcp.pop %v2474
    %v2493 = vmul.f32 1.0, %v2492
    %v2494 = vrcp.pop %v2475
    %v2495 = vmul.f32 1.0, %v2494
    %v2496 = vrcp.pop %v2476
    %v2497 = vmul.f32 1.0, %v2496
    %v2498 = vrcp.pop %v2477
    %v2499 = vmul.f32 1.0, %v2498
    %v2500 = vrcp.pop %v2478
    %v2501 = vmul.f32 1.0, %v2500
    %v2502 = vrcp.pop %v2479
    %v2503 = vmul.f32 1.0, %v2502
    %v2504 = vtanh.pop %v2428
    %v2505 = vtanh.pop %v2429
    %v2506 = vtanh.pop %v2430
    %v2507 = vtanh.pop %v2431
    %2512 = vrot.lane.b32.xlu0 %v2233, 16
    %v2513 = vpop.permute.xlu0 %2512
    %2514 = vrot.lane.b32.xlu0 %v2234, 16
    %v2515 = vpop.permute.xlu0 %2514
    %2516 = vrot.lane.b32.xlu0 %v2235, 16
    %v2517 = vpop.permute.xlu0 %2516
    %2518 = vrot.lane.b32.xlu0 %v2236, 16
    %v2519 = vpop.permute.xlu0 %2518
    %v2524 = vmul.f32 %v2489, %v2513
    %v2525 = vmul.f32 %v2491, %v2515
    %v2526 = vmul.f32 %v2493, %v2517
    %v2527 = vmul.f32 %v2495, %v2519
    %v2528 = vmul.f32 %v2481, %v2504
    %v2529 = vmul.f32 %v2483, %v2505
    %v2530 = vmul.f32 %v2485, %v2506
    %v2531 = vmul.f32 %v2487, %v2507
    %v2532 = vadd.f32 %v2524, %v2528
    %v2533 = vadd.f32 %v2525, %v2529
    %v2534 = vadd.f32 %v2526, %v2530
    %v2535 = vadd.f32 %v2527, %v2531
    %v2536 = vtanh.pop %v2532
    %v2537 = vtanh.pop %v2533
    %v2538 = vtanh.pop %v2534
    %v2539 = vtanh.pop %v2535
    %v2540 = vmul.f32 %v2497, %v2536
    %v2541 = vmul.f32 %v2499, %v2537
    %v2542 = vmul.f32 %v2501, %v2538
    %v2543 = vmul.f32 %v2503, %v2539
    %v2544 = vld [vmem:[%s1] sm:$0xff]
    %v2545 = vld [vmem:[%s1 + $0x8] sm:$0xff]
    %v2546 = vld [vmem:[%s1 + $0x10] sm:$0xff]
    %v2547 = vld [vmem:[%s1 + $0x18] sm:$0xff]
    %2552 = vrot.lane.b32.xlu0 %v2540, 16
    %v2553 = vpop.permute.xlu0 %2552
    %2554 = vrot.lane.b32.xlu0 %v2541, 16
    %v2555 = vpop.permute.xlu0 %2554
    %2556 = vrot.lane.b32.xlu0 %v2542, 16
    %v2557 = vpop.permute.xlu0 %2556
    %2558 = vrot.lane.b32.xlu0 %v2543, 16
    %v2559 = vpop.permute.xlu0 %2558
    %v2564 = vsub.f32 %v2544, %v2553
    %v2565 = vsub.f32 %v2545, %v2555
    %v2566 = vsub.f32 %v2546, %v2557
    %v2567 = vsub.f32 %v2547, %v2559
    %v2568 = vand.u32 2147483647, %v2564
    %v2569 = vand.u32 2147483647, %v2565
    %v2570 = vand.u32 2147483647, %v2566
    %v2571 = vand.u32 2147483647, %v2567
    %vm2572 = vcmask 130048
    %v2573 = vsel %vm2572, %v2568, 0.0
    %v2574 = vsel %vm2572, %v2569, 0.0
    %v2575 = vadd.f32 %v2573, %v2574
    %v2576 = vsel %vm2572, %v2570, 0.0
    %v2577 = vadd.f32 %v2575, %v2576
    %v2578 = vsel %vm2572, %v2571, 0.0
    %v2579 = vadd.f32 %v2577, %v2578
    %v2580 = vrot.slane %v2579, 4
    %v2581 = vadd.f32 %v2579, %v2580
    %v2582 = vrot.slane %v2581, 2
    %v2583 = vadd.f32 %v2581, %v2582
    %v2584 = vrot.slane %v2583, 1
    %v2585 = vadd.f32 %v2583, %v2584
    %v2586 = vld [vmem:[%s5] sm:$0x1]
    %2588 = vrot.lane.b32.xlu0 %v2585, 120
    %v2589 = vpop.permute.xlu0 %2588
    %v2591 = vsub.f32 %v2585, %v2589
    %v2592 = vmul.f32 %v2586, %v2591
    %v2593 = vadd.f32 %v2592, 1.0
    %v2594 = vmax.f32 %v2593, 0.0
    %vm2595 = vcmask 57344
    %2596 = vst.msk [vmem:[#allocation2] sm:$0x1] %vm2595, %v2594
    // Predicated region
    $region26: #{tpu_custom_call.1} parent=1 // pred_check
      _
    $region27: #{tpu_custom_call.1} parent=1 // pred_check_branch
      %2598 = sbr.rel (0) target = $region29
    $region28: #{tpu_custom_call.1} parent=1 // pred_region
      %s2600 = ssub.s32 16, 16
      %2601 = vsyncadd [#allocation3], %s2600
      %s2603 = sshll.u32 [#allocation2], 4
      %s2604 = int_to_ptr.vmem [resolvable:$true] %s2603
      %2606 = dma.vmem_to_hbm [thread:$0]  %s2604, 16, %s6, [#allocation3]
    $region29: #{tpu_custom_call.1} parent=1 // pred_fallthru
      _
    // Predicated region
    $region30: #{tpu_custom_call.1} parent=1 // pred_check
      _
    $region31: #{tpu_custom_call.1} parent=1 // pred_check_branch
      %2608 = sbr.rel (0) target = $region33
    $region32: #{tpu_custom_call.1} parent=1 // pred_region
      %2609 = dma.done [#allocation3], 16
    $region33: #{tpu_custom_call.1} parent=1 // pred_fallthru
      _
    %2610 = vsyncpa [#allocation3], 1

</llo_original>
